<compile_context>
chip_gen: v5e
topology: v5e:2x2
jax: 0.10.0
libtpu: 0.0.40
codegen_flags: <defaults>
</compile_context>

<pallas_src>
import functools

import jax
import jax.numpy as jnp
from jax.experimental import pallas as pl
from jax.experimental.pallas import tpu as pltpu


# ---------------------------------------------------------------------------
# Fused kernel: per (batch block, time chunk)
#   1) gates_x = x_chunk @ W_ih^T + b        (one big matmul, off serial path)
#   2) serial recurrence over the chunk: gates_x[t] + h_prev @ W_hh^T
#   3) y_chunk = log_softmax(h_chunk @ W_out^T + b_out)
# h/c are carried in VMEM scratch across time chunks; hN/cN written once.
# ---------------------------------------------------------------------------
def _fused_lstm_kernel(x_ref, h0_ref, c0_ref, wih_t_ref, bias_ref, whh_t_ref,
                       wout_t_ref, bout_ref,
                       y_ref, hn_ref, cn_ref,
                       h_sc, c_sc, gx_sc, hseq_sc,
                       *, t_real, mask_time):
    t_blk = pl.program_id(1)
    Tc, Bb, I = x_ref.shape
    H = h_sc.shape[-1]

    @pl.when(t_blk == 0)
    def _():
        h_sc[...] = h0_ref[0]
        c_sc[...] = c0_ref[0]

    # --- chunk input projection (hoisted off the per-step serial path) ------
    x2d = x_ref[...].reshape(Tc * Bb, I).astype(jnp.bfloat16)
    gx2d = (jnp.dot(x2d, wih_t_ref[...], preferred_element_type=jnp.float32)
            + bias_ref[...])
    gx_sc[...] = gx2d.reshape(Tc, Bb, 4 * H)

    whh_t = whh_t_ref[...]   # hoisted load, reused across the unrolled loop

    def step(tt, carry):
        h_prev, c_prev = carry
        # gates = (x_t @ W_ih^T + b) [precomputed] + h_prev @ W_hh^T
        gates = gx_sc[tt] + jnp.dot(h_prev.astype(jnp.bfloat16), whh_t,
                                    preferred_element_type=jnp.float32)
        # One full-tile sigmoid pass; tanh only on the g slice (halves EUP work).
        sig = jax.nn.sigmoid(gates)
        g_g = jnp.tanh(gates[:, 2 * H:3 * H])
        i_g = sig[:, 0 * H:1 * H]
        f_g = sig[:, 1 * H:2 * H]
        o_g = sig[:, 3 * H:4 * H]
        c_new = f_g * c_prev + i_g * g_g
        h_new = o_g * jnp.tanh(c_new)
        if mask_time:  # only emitted when T was padded up to a chunk multiple
            valid = (t_blk * Tc + tt) < t_real
            h_new = jnp.where(valid, h_new, h_prev)
            c_new = jnp.where(valid, c_new, c_prev)
        hseq_sc[tt] = h_new
        return (h_new, c_new)

    h_last, c_last = jax.lax.fori_loop(
        0, Tc, step, (h_sc[...], c_sc[...]), unroll=True)

    h_sc[...] = h_last
    c_sc[...] = c_last

    # --- chunk output projection + log-softmax (off the serial path) --------
    h2d = hseq_sc[...].reshape(Tc * Bb, H).astype(jnp.bfloat16)
    logits = (jnp.dot(h2d, wout_t_ref[...], preferred_element_type=jnp.float32)
              + bout_ref[...])
    m = jnp.max(logits, axis=-1, keepdims=True)
    z = logits - m
    lse = jnp.log(jnp.sum(jnp.exp(z), axis=-1, keepdims=True))
    y_ref[...] = (z - lse).reshape(Tc, Bb, -1).astype(y_ref.dtype)

    # hN/cN output blocks are resident across the time axis; write them once.
    @pl.when(t_blk == pl.num_programs(1) - 1)
    def _():
        hn_ref[0] = h_last.astype(hn_ref.dtype)
        cn_ref[0] = c_last.astype(cn_ref.dtype)


def simple_lstm_forward(x, h0, c0, params, *, time_chunk=16, batch_blocks=1):
    """x: (T, B, I) time-major; h0, c0: (1, B, H). Returns (y, (hN, cN)).

    time_chunk: timesteps per grid step (raise on v5e/v6e, halve on v7x).
    batch_blocks: split the padded batch into this many "parallel" grid blocks
                  (set 2 on v7x to shard the recurrence over both TensorCores).
    """
    T, B, I = x.shape
    H = h0.shape[-1]
    O = params["w_out"].shape[0]

    # --- MXU-friendly (in, out) weight layouts; bf16 operands, f32 biases ---
    wih_t = params["w_ih"].T.astype(jnp.bfloat16)                       # (I, 4H)
    whh_t = params["w_hh"].T.astype(jnp.bfloat16)                       # (H, 4H)
    bias = (params["b_ih"] + params["b_hh"]).reshape(1, 4 * H).astype(jnp.float32)
    wout_t = params["w_out"].T.astype(jnp.bfloat16)                     # (H, O)
    bout = params["b_out"].reshape(1, O).astype(jnp.float32)            # (1, O)

    # --- pad batch to the 8-sublane width -----------------------------------
    Bp = ((B + 7) // 8) * 8
    if Bp != B:
        pad = Bp - B
        x_p = jnp.pad(x, ((0, 0), (0, pad), (0, 0)))
        h0_p = jnp.pad(h0, ((0, 0), (0, pad), (0, 0)))
        c0_p = jnp.pad(c0, ((0, 0), (0, pad), (0, 0)))
    else:
        x_p, h0_p, c0_p = x, h0, c0

    # --- time chunking: pad T up rather than shrinking the chunk ------------
    Tc = max(1, min(int(time_chunk), T))
    Tp = -(-T // Tc) * Tc
    mask_time = (Tp != T)
    if mask_time:
        x_p = jnp.pad(x_p, ((0, Tp - T), (0, 0), (0, 0)))

    # --- batch blocks (per-block independent recurrence) --------------------
    nb = max(1, int(batch_blocks))
    if Bp % nb != 0 or (Bp // nb) % 8 != 0:
        nb = 1
    Bb = Bp // nb

    kernel = functools.partial(_fused_lstm_kernel, t_real=T, mask_time=mask_time)

    # --- VMEM budget: only raise the scoped limit when actually needed ------
    f32b, bf16b = 4, 2
    est = (2 * (Tc * Bb * I * f32b + Tc * Bb * O * f32b + 2 * Bb * H * f32b)     # x, y, hN, cN blocks (x2)
           + 2 * ((I * 4 * H + H * 4 * H + H * O) * bf16b + (4 * H + O) * f32b)  # weight/bias blocks
           + (2 * Bb * H + Tc * Bb * 4 * H + Tc * Bb * H) * f32b)                # h, c, gx, hseq scratch
    vmem_limit = None
    if 2 * est > (16 << 20):
        vmem_limit = int(min(max(2 * est, 32 << 20), 48 << 20))  # v7x-safe cap

    y_p, h_n, c_n = pl.pallas_call(
        kernel,
        out_shape=(
            jax.ShapeDtypeStruct((Tp, Bp, O), jnp.float32),
            jax.ShapeDtypeStruct((1, Bp, H), jnp.float32),
            jax.ShapeDtypeStruct((1, Bp, H), jnp.float32),
        ),
        grid_spec=pltpu.PrefetchScalarGridSpec(
            num_scalar_prefetch=0,
            grid=(nb, Tp // Tc),
            in_specs=[
                pl.BlockSpec((Tc, Bb, I), lambda b, t: (t, b, 0)),     # x chunk
                pl.BlockSpec((1, Bb, H), lambda b, t: (0, b, 0)),      # h0
                pl.BlockSpec((1, Bb, H), lambda b, t: (0, b, 0)),      # c0
                pl.BlockSpec((I, 4 * H), lambda b, t: (0, 0)),         # W_ih^T
                pl.BlockSpec((1, 4 * H), lambda b, t: (0, 0)),         # b_ih+b_hh
                pl.BlockSpec((H, 4 * H), lambda b, t: (0, 0)),         # W_hh^T
                pl.BlockSpec((H, O), lambda b, t: (0, 0)),             # W_out^T
                pl.BlockSpec((1, O), lambda b, t: (0, 0)),             # b_out
            ],
            out_specs=[
                pl.BlockSpec((Tc, Bb, O), lambda b, t: (t, b, 0)),     # y chunk
                pl.BlockSpec((1, Bb, H), lambda b, t: (0, b, 0)),      # hN
                pl.BlockSpec((1, Bb, H), lambda b, t: (0, b, 0)),      # cN
            ],
            scratch_shapes=[
                pltpu.VMEM((Bb, H), jnp.float32),            # h carry
                pltpu.VMEM((Bb, H), jnp.float32),            # c carry
                pltpu.VMEM((Tc, Bb, 4 * H), jnp.float32),    # gates_x chunk
                pltpu.VMEM((Tc, Bb, H), jnp.float32),        # h per step (for out proj)
            ],
        ),
        compiler_params=pltpu.CompilerParams(
            dimension_semantics=("parallel", "arbitrary"),
            vmem_limit_bytes=vmem_limit),
    )(x_p, h0_p, c0_p, wih_t, bias, whh_t, wout_t, bout)

    y = y_p[:T, :B, :]
    return y, (h_n[:, :B, :], c_n[:, :B, :])


# ---------------------------------------------------------------------------
# Pure-JAX references (validation only).
#   emulate_bf16=False : exact PyTorch-module math (f32).
#   emulate_bf16=True  : same bf16 matmul-operand casts as the kernel, so the
#                        structural comparison can use a tight tolerance.
# ---------------------------------------------------------------------------
def _reference_forward(x, h0, c0, params, *, emulate_bf16=False):
    T, B, I = x.shape
    H = h0.shape[-1]
    cast = (lambda a: a.astype(jnp.bfloat16)) if emulate_bf16 else (lambda a: a)
    wih_t = cast(params["w_ih"].T)
    whh_t = cast(params["w_hh"].T)
    wout_t = cast(params["w_out"].T)
    bias = params["b_ih"] + params["b_hh"]

    gx = (jnp.dot(cast(x.reshape(T * B, I)), wih_t,
                  preferred_element_type=jnp.float32)
          + bias).reshape(T, B, 4 * H)

    def step(carry, gx_t):
        h, c = carry
        gates = gx_t + jnp.dot(cast(h), whh_t, preferred_element_type=jnp.float32)
        sig = jax.nn.sigmoid(gates)
        g = jnp.tanh(gates[:, 2 * H:3 * H])
        i = sig[:, 0 * H:1 * H]
        f = sig[:, 1 * H:2 * H]
        o = sig[:, 3 * H:4 * H]
        c_new = f * c + i * g
        h_new = o * jnp.tanh(c_new)
        return (h_new, c_new), h_new

    (h_n, c_n), hs = jax.lax.scan(step, (h0[0], c0[0]), gx)
    logits = (jnp.dot(cast(hs.reshape(T * B, H)), wout_t,
                      preferred_element_type=jnp.float32)
              + params["b_out"]).reshape(T, B, -1)
    y = jax.nn.log_softmax(logits, axis=2)
    return y, (h_n[None], c_n[None])


if __name__ == "__main__":
    # Small shapes consistent with the module's forward (time-major LSTM).
    T, B, I, H, O = 8, 2, 16, 32, 8

    key = jax.random.PRNGKey(0)
    ks = jax.random.split(key, 8)
    scale = 1.0 / jnp.sqrt(H)
    params = {
        "w_ih":  jax.random.uniform(ks[0], (4 * H, I), jnp.float32, -scale, scale),
        "w_hh":  jax.random.uniform(ks[1], (4 * H, H), jnp.float32, -scale, scale),
        "b_ih":  jax.random.uniform(ks[2], (4 * H,),   jnp.float32, -scale, scale),
        "b_hh":  jax.random.uniform(ks[3], (4 * H,),   jnp.float32, -scale, scale),
        "w_out": jax.random.uniform(ks[4], (O, H),     jnp.float32, -scale, scale),
        "b_out": jax.random.uniform(ks[5], (O,),       jnp.float32, -scale, scale),
    }

    x = jax.random.normal(ks[6], (T, B, I), jnp.float32)
    h0 = jnp.zeros((1, B, H), jnp.float32)   # module's initHidden()
    c0 = jnp.zeros((1, B, H), jnp.float32)

    y, (h_n, c_n) = simple_lstm_forward(x, h0, c0, params)
    jax.block_until_ready((y, h_n, c_n))

    # Structural check vs bf16-operand-emulating reference (tight tolerance).
    y_b, (h_b, c_b) = _reference_forward(x, h0, c0, params, emulate_bf16=True)
    assert jnp.allclose(y, y_b, atol=5e-3, rtol=5e-3)
    assert jnp.allclose(h_n, h_b, atol=5e-3, rtol=5e-3)
    assert jnp.allclose(c_n, c_b, atol=5e-3, rtol=5e-3)

    # Numerical check vs the full-f32 PyTorch-equivalent reference.
    y_f, (h_f, c_f) = _reference_forward(x, h0, c0, params)
    assert jnp.allclose(y, y_f, atol=5e-2)
    assert jnp.allclose(h_n, h_f, atol=5e-2)
    assert jnp.allclose(c_n, c_f, atol=5e-2)

    print("KERNEL_OK")
</pallas_src>

<mosaic_0001>
module attributes {stable_mosaic.version = 11 : i64} {
  func.func @_fused_lstm_kernel(%arg0: i32, %arg1: i32, %arg2: memref<8x8x16xf32, #tpu.memory_space<vmem>>, %arg3: memref<1x8x32xf32, #tpu.memory_space<vmem>>, %arg4: memref<1x8x32xf32, #tpu.memory_space<vmem>>, %arg5: memref<16x128xbf16, #tpu.memory_space<vmem>>, %arg6: memref<1x128xf32, #tpu.memory_space<vmem>>, %arg7: memref<32x128xbf16, #tpu.memory_space<vmem>>, %arg8: memref<32x8xbf16, #tpu.memory_space<vmem>>, %arg9: memref<1x8xf32, #tpu.memory_space<vmem>>, %arg10: memref<8x8x8xf32, #tpu.memory_space<vmem>>, %arg11: memref<1x8x32xf32, #tpu.memory_space<vmem>>, %arg12: memref<1x8x32xf32, #tpu.memory_space<vmem>>, %arg13: memref<8x32xf32, #tpu.memory_space<vmem>>, %arg14: memref<8x32xf32, #tpu.memory_space<vmem>>, %arg15: memref<8x8x128xf32, #tpu.memory_space<vmem>>, %arg16: memref<8x8x32xf32, #tpu.memory_space<vmem>>) attributes {dimension_semantics = [#tpu.dimension_semantics<parallel>, #tpu.dimension_semantics<arbitrary>], iteration_bounds = array<i64: 1, 1>, scalar_prefetch = 0 : i64, scratch_operands = 4 : i64, tpu.core_type = #tpu.core_type<tc>, window_params = [{transform_indices = @transform_0, window_bounds = array<i64: 8, 8, 16>}, {transform_indices = @transform_1, window_bounds = array<i64: 1, 8, 32>}, {transform_indices = @transform_2, window_bounds = array<i64: 1, 8, 32>}, {pipeline_mode = #tpu.pipeline_mode<synchronous>, transform_indices = @transform_3, window_bounds = array<i64: 16, 128>}, {pipeline_mode = #tpu.pipeline_mode<synchronous>, transform_indices = @transform_4, window_bounds = array<i64: 1, 128>}, {pipeline_mode = #tpu.pipeline_mode<synchronous>, transform_indices = @transform_5, window_bounds = array<i64: 32, 128>}, {pipeline_mode = #tpu.pipeline_mode<synchronous>, transform_indices = @transform_6, window_bounds = array<i64: 32, 8>}, {pipeline_mode = #tpu.pipeline_mode<synchronous>, transform_indices = @transform_7, window_bounds = array<i64: 1, 8>}, {transform_indices = @transform_8, window_bounds = array<i64: 8, 8, 8>}, {transform_indices = @transform_9, window_bounds = array<i64: 1, 8, 32>}, {transform_indices = @transform_10, window_bounds = array<i64: 1, 8, 32>}]} {
    %c0_i32 = arith.constant 0 : i32
    %0 = arith.cmpi eq, %arg1, %c0_i32 : i32
    %1 = arith.extui %0 : i1 to i32
    %c0_i32_0 = arith.constant 0 : i32
    %2 = arith.cmpi ne, %1, %c0_i32_0 : i32
    scf.if %2 {
      %c0_84 = arith.constant 0 : index
      %c0_85 = arith.constant 0 : index
      %c0_86 = arith.constant 0 : index
      %241 = vector.load %arg3[%c0_84, %c0_85, %c0_86] : memref<1x8x32xf32, #tpu.memory_space<vmem>>, vector<1x8x32xf32>
      %242 = vector.shape_cast %241 : vector<1x8x32xf32> to vector<8x32xf32>
      %c0_87 = arith.constant 0 : index
      %c0_88 = arith.constant 0 : index
      %243 = vector.load %arg13[%c0_87, %c0_88] : memref<8x32xf32, #tpu.memory_space<vmem>>, vector<8x32xf32>
      tpu.vector_store %arg13[%c0_87, %c0_88], %242 {strides = array<i32>} : memref<8x32xf32, #tpu.memory_space<vmem>>, vector<8x32xf32>,
      %c0_89 = arith.constant 0 : index
      %c0_90 = arith.constant 0 : index
      %c0_91 = arith.constant 0 : index
      %244 = vector.load %arg4[%c0_89, %c0_90, %c0_91] : memref<1x8x32xf32, #tpu.memory_space<vmem>>, vector<1x8x32xf32>
      %245 = vector.shape_cast %244 : vector<1x8x32xf32> to vector<8x32xf32>
      %c0_92 = arith.constant 0 : index
      %c0_93 = arith.constant 0 : index
      %246 = vector.load %arg14[%c0_92, %c0_93] : memref<8x32xf32, #tpu.memory_space<vmem>>, vector<8x32xf32>
      tpu.vector_store %arg14[%c0_92, %c0_93], %245 {strides = array<i32>} : memref<8x32xf32, #tpu.memory_space<vmem>>, vector<8x32xf32>,
    } else {
    }
    %c0 = arith.constant 0 : index
    %c0_1 = arith.constant 0 : index
    %c0_2 = arith.constant 0 : index
    %3 = vector.load %arg2[%c0, %c0_1, %c0_2] : memref<8x8x16xf32, #tpu.memory_space<vmem>>, vector<8x8x16xf32>
    %4 = vector.shape_cast %3 : vector<8x8x16xf32> to vector<64x16xf32>
    %5 = arith.truncf %4 : vector<64x16xf32> to vector<64x16xbf16>
    %c0_3 = arith.constant 0 : index
    %c0_4 = arith.constant 0 : index
    %6 = vector.load %arg5[%c0_3, %c0_4] : memref<16x128xbf16, #tpu.memory_space<vmem>>, vector<16x128xbf16>
    %cst = arith.constant dense<0.000000e+00> : vector<64x128xf32>
    %7 = tpu.matmul %5, %6, %cst {dimension_numbers = #tpu.dot_dimension_numbers<[1], [0], [0], [1], [0, 0, 1, 1], [], []>} : vector<64x16xbf16>, vector<16x128xbf16>, vector<64x128xf32> -> vector<64x128xf32>
    %c0_5 = arith.constant 0 : index
    %c0_6 = arith.constant 0 : index
    %8 = vector.load %arg6[%c0_5, %c0_6] : memref<1x128xf32, #tpu.memory_space<vmem>>, vector<1x128xf32>
    %9 = vector.broadcast %8 : vector<1x128xf32> to vector<64x128xf32>
    %10 = arith.addf %7, %9 : vector<64x128xf32>
    %11 = vector.shape_cast %10 : vector<64x128xf32> to vector<8x8x128xf32>
    %c0_7 = arith.constant 0 : index
    %c0_8 = arith.constant 0 : index
    %c0_9 = arith.constant 0 : index
    %12 = vector.load %arg15[%c0_7, %c0_8, %c0_9] : memref<8x8x128xf32, #tpu.memory_space<vmem>>, vector<8x8x128xf32>
    tpu.vector_store %arg15[%c0_7, %c0_8, %c0_9], %11 {strides = array<i32>} : memref<8x8x128xf32, #tpu.memory_space<vmem>>, vector<8x8x128xf32>,
    %c0_10 = arith.constant 0 : index
    %c0_11 = arith.constant 0 : index
    %13 = vector.load %arg7[%c0_10, %c0_11] : memref<32x128xbf16, #tpu.memory_space<vmem>>, vector<32x128xbf16>
    %c0_12 = arith.constant 0 : index
    %c0_13 = arith.constant 0 : index
    %14 = vector.load %arg13[%c0_12, %c0_13] : memref<8x32xf32, #tpu.memory_space<vmem>>, vector<8x32xf32>
    %c0_14 = arith.constant 0 : index
    %c0_15 = arith.constant 0 : index
    %15 = vector.load %arg14[%c0_14, %c0_15] : memref<8x32xf32, #tpu.memory_space<vmem>>, vector<8x32xf32>
    %c0_i32_16 = arith.constant 0 : i32
    %16 = arith.index_cast %c0_i32_16 : i32 to index
    %c0_17 = arith.constant 0 : index
    %c0_18 = arith.constant 0 : index
    %17 = vector.load %arg15[%16, %c0_17, %c0_18] : memref<8x8x128xf32, #tpu.memory_space<vmem>>, vector<1x8x128xf32>
    %18 = vector.shape_cast %17 : vector<1x8x128xf32> to vector<8x128xf32>
    %19 = arith.truncf %14 : vector<8x32xf32> to vector<8x32xbf16>
    %cst_19 = arith.constant dense<0.000000e+00> : vector<8x128xf32>
    %20 = tpu.matmul %19, %13, %cst_19 {dimension_numbers = #tpu.dot_dimension_numbers<[1], [0], [0], [1], [0, 0, 1, 1], [], []>} : vector<8x32xbf16>, vector<32x128xbf16>, vector<8x128xf32> -> vector<8x128xf32>
    %21 = arith.addf %18, %20 : vector<8x128xf32>
    %22 = arith.negf %21 : vector<8x128xf32>
    %23 = math.exp %22 : vector<8x128xf32>
    %cst_20 = arith.constant 1.000000e+00 : f32
    %24 = vector.broadcast %cst_20 : f32 to vector<8x128xf32>
    %25 = arith.addf %24, %23 : vector<8x128xf32>
    %26 = arith.divf %24, %25 : vector<8x128xf32>
    %27 = vector.extract_strided_slice %21 {offsets = [0, 64], sizes = [8, 32], strides = [1, 1]} : vector<8x128xf32> to vector<8x32xf32>
    %28 = math.tanh %27 : vector<8x32xf32>
    %29 = vector.extract_strided_slice %26 {offsets = [0, 0], sizes = [8, 32], strides = [1, 1]} : vector<8x128xf32> to vector<8x32xf32>
    %30 = vector.extract_strided_slice %26 {offsets = [0, 32], sizes = [8, 32], strides = [1, 1]} : vector<8x128xf32> to vector<8x32xf32>
    %31 = vector.extract_strided_slice %26 {offsets = [0, 96], sizes = [8, 32], strides = [1, 1]} : vector<8x128xf32> to vector<8x32xf32>
    %32 = arith.mulf %30, %15 : vector<8x32xf32>
    %33 = arith.mulf %29, %28 : vector<8x32xf32>
    %34 = arith.addf %32, %33 : vector<8x32xf32>
    %35 = math.tanh %34 : vector<8x32xf32>
    %36 = arith.mulf %31, %35 : vector<8x32xf32>
    %37 = arith.index_cast %c0_i32_16 : i32 to index
    %c0_21 = arith.constant 0 : index
    %c0_22 = arith.constant 0 : index
    %38 = vector.load %arg16[%37, %c0_21, %c0_22] : memref<8x8x32xf32, #tpu.memory_space<vmem>>, vector<1x8x32xf32>
    %39 = vector.shape_cast %38 : vector<1x8x32xf32> to vector<8x32xf32>
    %40 = vector.shape_cast %36 : vector<8x32xf32> to vector<1x8x32xf32>
    tpu.vector_store %arg16[%37, %c0_21, %c0_22], %40 {strides = array<i32>} : memref<8x8x32xf32, #tpu.memory_space<vmem>>, vector<1x8x32xf32>,
    %c1_i32 = arith.constant 1 : i32
    %41 = arith.index_cast %c1_i32 : i32 to index
    %c0_23 = arith.constant 0 : index
    %c0_24 = arith.constant 0 : index
    %42 = vector.load %arg15[%41, %c0_23, %c0_24] : memref<8x8x128xf32, #tpu.memory_space<vmem>>, vector<1x8x128xf32>
    %43 = vector.shape_cast %42 : vector<1x8x128xf32> to vector<8x128xf32>
    %44 = arith.truncf %36 : vector<8x32xf32> to vector<8x32xbf16>
    %cst_25 = arith.constant dense<0.000000e+00> : vector<8x128xf32>
    %45 = tpu.matmul %44, %13, %cst_25 {dimension_numbers = #tpu.dot_dimension_numbers<[1], [0], [0], [1], [0, 0, 1, 1], [], []>} : vector<8x32xbf16>, vector<32x128xbf16>, vector<8x128xf32> -> vector<8x128xf32>
    %46 = arith.addf %43, %45 : vector<8x128xf32>
    %47 = arith.negf %46 : vector<8x128xf32>
    %48 = math.exp %47 : vector<8x128xf32>
    %cst_26 = arith.constant 1.000000e+00 : f32
    %49 = vector.broadcast %cst_26 : f32 to vector<8x128xf32>
    %50 = arith.addf %49, %48 : vector<8x128xf32>
    %51 = arith.divf %49, %50 : vector<8x128xf32>
    %52 = vector.extract_strided_slice %46 {offsets = [0, 64], sizes = [8, 32], strides = [1, 1]} : vector<8x128xf32> to vector<8x32xf32>
    %53 = math.tanh %52 : vector<8x32xf32>
    %54 = vector.extract_strided_slice %51 {offsets = [0, 0], sizes = [8, 32], strides = [1, 1]} : vector<8x128xf32> to vector<8x32xf32>
    %55 = vector.extract_strided_slice %51 {offsets = [0, 32], sizes = [8, 32], strides = [1, 1]} : vector<8x128xf32> to vector<8x32xf32>
    %56 = vector.extract_strided_slice %51 {offsets = [0, 96], sizes = [8, 32], strides = [1, 1]} : vector<8x128xf32> to vector<8x32xf32>
    %57 = arith.mulf %55, %34 : vector<8x32xf32>
    %58 = arith.mulf %54, %53 : vector<8x32xf32>
    %59 = arith.addf %57, %58 : vector<8x32xf32>
    %60 = math.tanh %59 : vector<8x32xf32>
    %61 = arith.mulf %56, %60 : vector<8x32xf32>
    %62 = arith.index_cast %c1_i32 : i32 to index
    %c0_27 = arith.constant 0 : index
    %c0_28 = arith.constant 0 : index
    %63 = vector.load %arg16[%62, %c0_27, %c0_28] : memref<8x8x32xf32, #tpu.memory_space<vmem>>, vector<1x8x32xf32>
    %64 = vector.shape_cast %63 : vector<1x8x32xf32> to vector<8x32xf32>
    %65 = vector.shape_cast %61 : vector<8x32xf32> to vector<1x8x32xf32>
    tpu.vector_store %arg16[%62, %c0_27, %c0_28], %65 {strides = array<i32>} : memref<8x8x32xf32, #tpu.memory_space<vmem>>, vector<1x8x32xf32>,
    %c2_i32 = arith.constant 2 : i32
    %66 = arith.index_cast %c2_i32 : i32 to index
    %c0_29 = arith.constant 0 : index
    %c0_30 = arith.constant 0 : index
    %67 = vector.load %arg15[%66, %c0_29, %c0_30] : memref<8x8x128xf32, #tpu.memory_space<vmem>>, vector<1x8x128xf32>
    %68 = vector.shape_cast %67 : vector<1x8x128xf32> to vector<8x128xf32>
    %69 = arith.truncf %61 : vector<8x32xf32> to vector<8x32xbf16>
    %cst_31 = arith.constant dense<0.000000e+00> : vector<8x128xf32>
    %70 = tpu.matmul %69, %13, %cst_31 {dimension_numbers = #tpu.dot_dimension_numbers<[1], [0], [0], [1], [0, 0, 1, 1], [], []>} : vector<8x32xbf16>, vector<32x128xbf16>, vector<8x128xf32> -> vector<8x128xf32>
    %71 = arith.addf %68, %70 : vector<8x128xf32>
    %72 = arith.negf %71 : vector<8x128xf32>
    %73 = math.exp %72 : vector<8x128xf32>
    %cst_32 = arith.constant 1.000000e+00 : f32
    %74 = vector.broadcast %cst_32 : f32 to vector<8x128xf32>
    %75 = arith.addf %74, %73 : vector<8x128xf32>
    %76 = arith.divf %74, %75 : vector<8x128xf32>
    %77 = vector.extract_strided_slice %71 {offsets = [0, 64], sizes = [8, 32], strides = [1, 1]} : vector<8x128xf32> to vector<8x32xf32>
    %78 = math.tanh %77 : vector<8x32xf32>
    %79 = vector.extract_strided_slice %76 {offsets = [0, 0], sizes = [8, 32], strides = [1, 1]} : vector<8x128xf32> to vector<8x32xf32>
    %80 = vector.extract_strided_slice %76 {offsets = [0, 32], sizes = [8, 32], strides = [1, 1]} : vector<8x128xf32> to vector<8x32xf32>
    %81 = vector.extract_strided_slice %76 {offsets = [0, 96], sizes = [8, 32], strides = [1, 1]} : vector<8x128xf32> to vector<8x32xf32>
    %82 = arith.mulf %80, %59 : vector<8x32xf32>
    %83 = arith.mulf %79, %78 : vector<8x32xf32>
    %84 = arith.addf %82, %83 : vector<8x32xf32>
    %85 = math.tanh %84 : vector<8x32xf32>
    %86 = arith.mulf %81, %85 : vector<8x32xf32>
    %87 = arith.index_cast %c2_i32 : i32 to index
    %c0_33 = arith.constant 0 : index
    %c0_34 = arith.constant 0 : index
    %88 = vector.load %arg16[%87, %c0_33, %c0_34] : memref<8x8x32xf32, #tpu.memory_space<vmem>>, vector<1x8x32xf32>
    %89 = vector.shape_cast %88 : vector<1x8x32xf32> to vector<8x32xf32>
    %90 = vector.shape_cast %86 : vector<8x32xf32> to vector<1x8x32xf32>
    tpu.vector_store %arg16[%87, %c0_33, %c0_34], %90 {strides = array<i32>} : memref<8x8x32xf32, #tpu.memory_space<vmem>>, vector<1x8x32xf32>,
    %c3_i32 = arith.constant 3 : i32
    %91 = arith.index_cast %c3_i32 : i32 to index
    %c0_35 = arith.constant 0 : index
    %c0_36 = arith.constant 0 : index
    %92 = vector.load %arg15[%91, %c0_35, %c0_36] : memref<8x8x128xf32, #tpu.memory_space<vmem>>, vector<1x8x128xf32>
    %93 = vector.shape_cast %92 : vector<1x8x128xf32> to vector<8x128xf32>
    %94 = arith.truncf %86 : vector<8x32xf32> to vector<8x32xbf16>
    %cst_37 = arith.constant dense<0.000000e+00> : vector<8x128xf32>
    %95 = tpu.matmul %94, %13, %cst_37 {dimension_numbers = #tpu.dot_dimension_numbers<[1], [0], [0], [1], [0, 0, 1, 1], [], []>} : vector<8x32xbf16>, vector<32x128xbf16>, vector<8x128xf32> -> vector<8x128xf32>
    %96 = arith.addf %93, %95 : vector<8x128xf32>
    %97 = arith.negf %96 : vector<8x128xf32>
    %98 = math.exp %97 : vector<8x128xf32>
    %cst_38 = arith.constant 1.000000e+00 : f32
    %99 = vector.broadcast %cst_38 : f32 to vector<8x128xf32>
    %100 = arith.addf %99, %98 : vector<8x128xf32>
    %101 = arith.divf %99, %100 : vector<8x128xf32>
    %102 = vector.extract_strided_slice %96 {offsets = [0, 64], sizes = [8, 32], strides = [1, 1]} : vector<8x128xf32> to vector<8x32xf32>
    %103 = math.tanh %102 : vector<8x32xf32>
    %104 = vector.extract_strided_slice %101 {offsets = [0, 0], sizes = [8, 32], strides = [1, 1]} : vector<8x128xf32> to vector<8x32xf32>
    %105 = vector.extract_strided_slice %101 {offsets = [0, 32], sizes = [8, 32], strides = [1, 1]} : vector<8x128xf32> to vector<8x32xf32>
    %106 = vector.extract_strided_slice %101 {offsets = [0, 96], sizes = [8, 32], strides = [1, 1]} : vector<8x128xf32> to vector<8x32xf32>
    %107 = arith.mulf %105, %84 : vector<8x32xf32>
    %108 = arith.mulf %104, %103 : vector<8x32xf32>
    %109 = arith.addf %107, %108 : vector<8x32xf32>
    %110 = math.tanh %109 : vector<8x32xf32>
    %111 = arith.mulf %106, %110 : vector<8x32xf32>
    %112 = arith.index_cast %c3_i32 : i32 to index
    %c0_39 = arith.constant 0 : index
    %c0_40 = arith.constant 0 : index
    %113 = vector.load %arg16[%112, %c0_39, %c0_40] : memref<8x8x32xf32, #tpu.memory_space<vmem>>, vector<1x8x32xf32>
    %114 = vector.shape_cast %113 : vector<1x8x32xf32> to vector<8x32xf32>
    %115 = vector.shape_cast %111 : vector<8x32xf32> to vector<1x8x32xf32>
    tpu.vector_store %arg16[%112, %c0_39, %c0_40], %115 {strides = array<i32>} : memref<8x8x32xf32, #tpu.memory_space<vmem>>, vector<1x8x32xf32>,
    %c4_i32 = arith.constant 4 : i32
    %116 = arith.index_cast %c4_i32 : i32 to index
    %c0_41 = arith.constant 0 : index
    %c0_42 = arith.constant 0 : index
    %117 = vector.load %arg15[%116, %c0_41, %c0_42] : memref<8x8x128xf32, #tpu.memory_space<vmem>>, vector<1x8x128xf32>
    %118 = vector.shape_cast %117 : vector<1x8x128xf32> to vector<8x128xf32>
    %119 = arith.truncf %111 : vector<8x32xf32> to vector<8x32xbf16>
    %cst_43 = arith.constant dense<0.000000e+00> : vector<8x128xf32>
    %120 = tpu.matmul %119, %13, %cst_43 {dimension_numbers = #tpu.dot_dimension_numbers<[1], [0], [0], [1], [0, 0, 1, 1], [], []>} : vector<8x32xbf16>, vector<32x128xbf16>, vector<8x128xf32> -> vector<8x128xf32>
    %121 = arith.addf %118, %120 : vector<8x128xf32>
    %122 = arith.negf %121 : vector<8x128xf32>
    %123 = math.exp %122 : vector<8x128xf32>
    %cst_44 = arith.constant 1.000000e+00 : f32
    %124 = vector.broadcast %cst_44 : f32 to vector<8x128xf32>
    %125 = arith.addf %124, %123 : vector<8x128xf32>
    %126 = arith.divf %124, %125 : vector<8x128xf32>
    %127 = vector.extract_strided_slice %121 {offsets = [0, 64], sizes = [8, 32], strides = [1, 1]} : vector<8x128xf32> to vector<8x32xf32>
    %128 = math.tanh %127 : vector<8x32xf32>
    %129 = vector.extract_strided_slice %126 {offsets = [0, 0], sizes = [8, 32], strides = [1, 1]} : vector<8x128xf32> to vector<8x32xf32>
    %130 = vector.extract_strided_slice %126 {offsets = [0, 32], sizes = [8, 32], strides = [1, 1]} : vector<8x128xf32> to vector<8x32xf32>
    %131 = vector.extract_strided_slice %126 {offsets = [0, 96], sizes = [8, 32], strides = [1, 1]} : vector<8x128xf32> to vector<8x32xf32>
    %132 = arith.mulf %130, %109 : vector<8x32xf32>
    %133 = arith.mulf %129, %128 : vector<8x32xf32>
    %134 = arith.addf %132, %133 : vector<8x32xf32>
    %135 = math.tanh %134 : vector<8x32xf32>
    %136 = arith.mulf %131, %135 : vector<8x32xf32>
    %137 = arith.index_cast %c4_i32 : i32 to index
    %c0_45 = arith.constant 0 : index
    %c0_46 = arith.constant 0 : index
    %138 = vector.load %arg16[%137, %c0_45, %c0_46] : memref<8x8x32xf32, #tpu.memory_space<vmem>>, vector<1x8x32xf32>
    %139 = vector.shape_cast %138 : vector<1x8x32xf32> to vector<8x32xf32>
    %140 = vector.shape_cast %136 : vector<8x32xf32> to vector<1x8x32xf32>
    tpu.vector_store %arg16[%137, %c0_45, %c0_46], %140 {strides = array<i32>} : memref<8x8x32xf32, #tpu.memory_space<vmem>>, vector<1x8x32xf32>,
    %c5_i32 = arith.constant 5 : i32
    %141 = arith.index_cast %c5_i32 : i32 to index
    %c0_47 = arith.constant 0 : index
    %c0_48 = arith.constant 0 : index
    %142 = vector.load %arg15[%141, %c0_47, %c0_48] : memref<8x8x128xf32, #tpu.memory_space<vmem>>, vector<1x8x128xf32>
    %143 = vector.shape_cast %142 : vector<1x8x128xf32> to vector<8x128xf32>
    %144 = arith.truncf %136 : vector<8x32xf32> to vector<8x32xbf16>
    %cst_49 = arith.constant dense<0.000000e+00> : vector<8x128xf32>
    %145 = tpu.matmul %144, %13, %cst_49 {dimension_numbers = #tpu.dot_dimension_numbers<[1], [0], [0], [1], [0, 0, 1, 1], [], []>} : vector<8x32xbf16>, vector<32x128xbf16>, vector<8x128xf32> -> vector<8x128xf32>
    %146 = arith.addf %143, %145 : vector<8x128xf32>
    %147 = arith.negf %146 : vector<8x128xf32>
    %148 = math.exp %147 : vector<8x128xf32>
    %cst_50 = arith.constant 1.000000e+00 : f32
    %149 = vector.broadcast %cst_50 : f32 to vector<8x128xf32>
    %150 = arith.addf %149, %148 : vector<8x128xf32>
    %151 = arith.divf %149, %150 : vector<8x128xf32>
    %152 = vector.extract_strided_slice %146 {offsets = [0, 64], sizes = [8, 32], strides = [1, 1]} : vector<8x128xf32> to vector<8x32xf32>
    %153 = math.tanh %152 : vector<8x32xf32>
    %154 = vector.extract_strided_slice %151 {offsets = [0, 0], sizes = [8, 32], strides = [1, 1]} : vector<8x128xf32> to vector<8x32xf32>
    %155 = vector.extract_strided_slice %151 {offsets = [0, 32], sizes = [8, 32], strides = [1, 1]} : vector<8x128xf32> to vector<8x32xf32>
    %156 = vector.extract_strided_slice %151 {offsets = [0, 96], sizes = [8, 32], strides = [1, 1]} : vector<8x128xf32> to vector<8x32xf32>
    %157 = arith.mulf %155, %134 : vector<8x32xf32>
    %158 = arith.mulf %154, %153 : vector<8x32xf32>
    %159 = arith.addf %157, %158 : vector<8x32xf32>
    %160 = math.tanh %159 : vector<8x32xf32>
    %161 = arith.mulf %156, %160 : vector<8x32xf32>
    %162 = arith.index_cast %c5_i32 : i32 to index
    %c0_51 = arith.constant 0 : index
    %c0_52 = arith.constant 0 : index
    %163 = vector.load %arg16[%162, %c0_51, %c0_52] : memref<8x8x32xf32, #tpu.memory_space<vmem>>, vector<1x8x32xf32>
    %164 = vector.shape_cast %163 : vector<1x8x32xf32> to vector<8x32xf32>
    %165 = vector.shape_cast %161 : vector<8x32xf32> to vector<1x8x32xf32>
    tpu.vector_store %arg16[%162, %c0_51, %c0_52], %165 {strides = array<i32>} : memref<8x8x32xf32, #tpu.memory_space<vmem>>, vector<1x8x32xf32>,
    %c6_i32 = arith.constant 6 : i32
    %166 = arith.index_cast %c6_i32 : i32 to index
    %c0_53 = arith.constant 0 : index
    %c0_54 = arith.constant 0 : index
    %167 = vector.load %arg15[%166, %c0_53, %c0_54] : memref<8x8x128xf32, #tpu.memory_space<vmem>>, vector<1x8x128xf32>
    %168 = vector.shape_cast %167 : vector<1x8x128xf32> to vector<8x128xf32>
    %169 = arith.truncf %161 : vector<8x32xf32> to vector<8x32xbf16>
    %cst_55 = arith.constant dense<0.000000e+00> : vector<8x128xf32>
    %170 = tpu.matmul %169, %13, %cst_55 {dimension_numbers = #tpu.dot_dimension_numbers<[1], [0], [0], [1], [0, 0, 1, 1], [], []>} : vector<8x32xbf16>, vector<32x128xbf16>, vector<8x128xf32> -> vector<8x128xf32>
    %171 = arith.addf %168, %170 : vector<8x128xf32>
    %172 = arith.negf %171 : vector<8x128xf32>
    %173 = math.exp %172 : vector<8x128xf32>
    %cst_56 = arith.constant 1.000000e+00 : f32
    %174 = vector.broadcast %cst_56 : f32 to vector<8x128xf32>
    %175 = arith.addf %174, %173 : vector<8x128xf32>
    %176 = arith.divf %174, %175 : vector<8x128xf32>
    %177 = vector.extract_strided_slice %171 {offsets = [0, 64], sizes = [8, 32], strides = [1, 1]} : vector<8x128xf32> to vector<8x32xf32>
    %178 = math.tanh %177 : vector<8x32xf32>
    %179 = vector.extract_strided_slice %176 {offsets = [0, 0], sizes = [8, 32], strides = [1, 1]} : vector<8x128xf32> to vector<8x32xf32>
    %180 = vector.extract_strided_slice %176 {offsets = [0, 32], sizes = [8, 32], strides = [1, 1]} : vector<8x128xf32> to vector<8x32xf32>
    %181 = vector.extract_strided_slice %176 {offsets = [0, 96], sizes = [8, 32], strides = [1, 1]} : vector<8x128xf32> to vector<8x32xf32>
    %182 = arith.mulf %180, %159 : vector<8x32xf32>
    %183 = arith.mulf %179, %178 : vector<8x32xf32>
    %184 = arith.addf %182, %183 : vector<8x32xf32>
    %185 = math.tanh %184 : vector<8x32xf32>
    %186 = arith.mulf %181, %185 : vector<8x32xf32>
    %187 = arith.index_cast %c6_i32 : i32 to index
    %c0_57 = arith.constant 0 : index
    %c0_58 = arith.constant 0 : index
    %188 = vector.load %arg16[%187, %c0_57, %c0_58] : memref<8x8x32xf32, #tpu.memory_space<vmem>>, vector<1x8x32xf32>
    %189 = vector.shape_cast %188 : vector<1x8x32xf32> to vector<8x32xf32>
    %190 = vector.shape_cast %186 : vector<8x32xf32> to vector<1x8x32xf32>
    tpu.vector_store %arg16[%187, %c0_57, %c0_58], %190 {strides = array<i32>} : memref<8x8x32xf32, #tpu.memory_space<vmem>>, vector<1x8x32xf32>,
    %c7_i32 = arith.constant 7 : i32
    %191 = arith.index_cast %c7_i32 : i32 to index
    %c0_59 = arith.constant 0 : index
    %c0_60 = arith.constant 0 : index
    %192 = vector.load %arg15[%191, %c0_59, %c0_60] : memref<8x8x128xf32, #tpu.memory_space<vmem>>, vector<1x8x128xf32>
    %193 = vector.shape_cast %192 : vector<1x8x128xf32> to vector<8x128xf32>
    %194 = arith.truncf %186 : vector<8x32xf32> to vector<8x32xbf16>
    %cst_61 = arith.constant dense<0.000000e+00> : vector<8x128xf32>
    %195 = tpu.matmul %194, %13, %cst_61 {dimension_numbers = #tpu.dot_dimension_numbers<[1], [0], [0], [1], [0, 0, 1, 1], [], []>} : vector<8x32xbf16>, vector<32x128xbf16>, vector<8x128xf32> -> vector<8x128xf32>
    %196 = arith.addf %193, %195 : vector<8x128xf32>
    %197 = arith.negf %196 : vector<8x128xf32>
    %198 = math.exp %197 : vector<8x128xf32>
    %cst_62 = arith.constant 1.000000e+00 : f32
    %199 = vector.broadcast %cst_62 : f32 to vector<8x128xf32>
    %200 = arith.addf %199, %198 : vector<8x128xf32>
    %201 = arith.divf %199, %200 : vector<8x128xf32>
    %202 = vector.extract_strided_slice %196 {offsets = [0, 64], sizes = [8, 32], strides = [1, 1]} : vector<8x128xf32> to vector<8x32xf32>
    %203 = math.tanh %202 : vector<8x32xf32>
    %204 = vector.extract_strided_slice %201 {offsets = [0, 0], sizes = [8, 32], strides = [1, 1]} : vector<8x128xf32> to vector<8x32xf32>
    %205 = vector.extract_strided_slice %201 {offsets = [0, 32], sizes = [8, 32], strides = [1, 1]} : vector<8x128xf32> to vector<8x32xf32>
    %206 = vector.extract_strided_slice %201 {offsets = [0, 96], sizes = [8, 32], strides = [1, 1]} : vector<8x128xf32> to vector<8x32xf32>
    %207 = arith.mulf %205, %184 : vector<8x32xf32>
    %208 = arith.mulf %204, %203 : vector<8x32xf32>
    %209 = arith.addf %207, %208 : vector<8x32xf32>
    %210 = math.tanh %209 : vector<8x32xf32>
    %211 = arith.mulf %206, %210 : vector<8x32xf32>
    %212 = arith.index_cast %c7_i32 : i32 to index
    %c0_63 = arith.constant 0 : index
    %c0_64 = arith.constant 0 : index
    %213 = vector.load %arg16[%212, %c0_63, %c0_64] : memref<8x8x32xf32, #tpu.memory_space<vmem>>, vector<1x8x32xf32>
    %214 = vector.shape_cast %213 : vector<1x8x32xf32> to vector<8x32xf32>
    %215 = vector.shape_cast %211 : vector<8x32xf32> to vector<1x8x32xf32>
    tpu.vector_store %arg16[%212, %c0_63, %c0_64], %215 {strides = array<i32>} : memref<8x8x32xf32, #tpu.memory_space<vmem>>, vector<1x8x32xf32>,
    %c8_i32 = arith.constant 8 : i32
    %c0_65 = arith.constant 0 : index
    %c0_66 = arith.constant 0 : index
    %216 = vector.load %arg13[%c0_65, %c0_66] : memref<8x32xf32, #tpu.memory_space<vmem>>, vector<8x32xf32>
    tpu.vector_store %arg13[%c0_65, %c0_66], %211 {strides = array<i32>} : memref<8x32xf32, #tpu.memory_space<vmem>>, vector<8x32xf32>,
    %c0_67 = arith.constant 0 : index
    %c0_68 = arith.constant 0 : index
    %217 = vector.load %arg14[%c0_67, %c0_68] : memref<8x32xf32, #tpu.memory_space<vmem>>, vector<8x32xf32>
    tpu.vector_store %arg14[%c0_67, %c0_68], %209 {strides = array<i32>} : memref<8x32xf32, #tpu.memory_space<vmem>>, vector<8x32xf32>,
    %c0_69 = arith.constant 0 : index
    %c0_70 = arith.constant 0 : index
    %c0_71 = arith.constant 0 : index
    %218 = vector.load %arg16[%c0_69, %c0_70, %c0_71] : memref<8x8x32xf32, #tpu.memory_space<vmem>>, vector<8x8x32xf32>
    %219 = vector.shape_cast %218 : vector<8x8x32xf32> to vector<64x32xf32>
    %220 = arith.truncf %219 : vector<64x32xf32> to vector<64x32xbf16>
    %c0_72 = arith.constant 0 : index
    %c0_73 = arith.constant 0 : index
    %221 = vector.load %arg8[%c0_72, %c0_73] : memref<32x8xbf16, #tpu.memory_space<vmem>>, vector<32x8xbf16>
    %cst_74 = arith.constant dense<0.000000e+00> : vector<64x8xf32>
    %222 = tpu.matmul %220, %221, %cst_74 {dimension_numbers = #tpu.dot_dimension_numbers<[1], [0], [0], [1], [0, 0, 1, 1], [], []>} : vector<64x32xbf16>, vector<32x8xbf16>, vector<64x8xf32> -> vector<64x8xf32>
    %c0_75 = arith.constant 0 : index
    %c0_76 = arith.constant 0 : index
    %223 = vector.load %arg9[%c0_75, %c0_76] : memref<1x8xf32, #tpu.memory_space<vmem>>, vector<1x8xf32>
    %224 = vector.broadcast %223 : vector<1x8xf32> to vector<64x8xf32>
    %225 = arith.addf %222, %224 : vector<64x8xf32>
    %cst_77 = arith.constant dense<0xFF800000> : vector<64xf32>
    %226 = vector.multi_reduction <maximumf>, %225, %cst_77 [1] : vector<64x8xf32> to vector<64xf32>
    %227 = vector.shape_cast %226 : vector<64xf32> to vector<64x1xf32>
    %228 = vector.broadcast %227 : vector<64x1xf32> to vector<64x8xf32>
    %229 = arith.subf %225, %228 : vector<64x8xf32>
    %230 = math.exp %229 : vector<64x8xf32>
    %cst_78 = arith.constant dense<0.000000e+00> : vector<64xf32>
    %231 = vector.multi_reduction <add>, %230, %cst_78 [1] : vector<64x8xf32> to vector<64xf32>
    %232 = vector.shape_cast %231 : vector<64xf32> to vector<64x1xf32>
    %233 = math.log %232 : vector<64x1xf32>
    %234 = vector.broadcast %233 : vector<64x1xf32> to vector<64x8xf32>
    %235 = arith.subf %229, %234 : vector<64x8xf32>
    %236 = vector.shape_cast %235 : vector<64x8xf32> to vector<8x8x8xf32>
    %c0_79 = arith.constant 0 : index
    %c0_80 = arith.constant 0 : index
    %c0_81 = arith.constant 0 : index
    %237 = vector.load %arg10[%c0_79, %c0_80, %c0_81] : memref<8x8x8xf32, #tpu.memory_space<vmem>>, vector<8x8x8xf32>
    tpu.vector_store %arg10[%c0_79, %c0_80, %c0_81], %236 {strides = array<i32>} : memref<8x8x8xf32, #tpu.memory_space<vmem>>, vector<8x8x8xf32>,
    %c0_i32_82 = arith.constant 0 : i32
    %238 = arith.cmpi eq, %arg1, %c0_i32_82 : i32
    %239 = arith.extui %238 : i1 to i32
    %c0_i32_83 = arith.constant 0 : i32
    %240 = arith.cmpi ne, %239, %c0_i32_83 : i32
    scf.if %240 {
      %c0_84 = arith.constant 0 : index
      %c0_85 = arith.constant 0 : index
      %c0_86 = arith.constant 0 : index
      %241 = vector.load %arg11[%c0_84, %c0_85, %c0_86] : memref<1x8x32xf32, #tpu.memory_space<vmem>>, vector<1x8x32xf32>
      %242 = vector.shape_cast %241 : vector<1x8x32xf32> to vector<8x32xf32>
      %243 = vector.shape_cast %211 : vector<8x32xf32> to vector<1x8x32xf32>
      tpu.vector_store %arg11[%c0_84, %c0_85, %c0_86], %243 {strides = array<i32>} : memref<1x8x32xf32, #tpu.memory_space<vmem>>, vector<1x8x32xf32>,
      %c0_87 = arith.constant 0 : index
      %c0_88 = arith.constant 0 : index
      %c0_89 = arith.constant 0 : index
      %244 = vector.load %arg12[%c0_87, %c0_88, %c0_89] : memref<1x8x32xf32, #tpu.memory_space<vmem>>, vector<1x8x32xf32>
      %245 = vector.shape_cast %244 : vector<1x8x32xf32> to vector<8x32xf32>
      %246 = vector.shape_cast %209 : vector<8x32xf32> to vector<1x8x32xf32>
      tpu.vector_store %arg12[%c0_87, %c0_88, %c0_89], %246 {strides = array<i32>} : memref<1x8x32xf32, #tpu.memory_space<vmem>>, vector<1x8x32xf32>,
    } else {
    }
    return
  }
  func.func @transform_0(%arg0: i32, %arg1: i32) -> (i32, i32, i32) {
    %c0_i32 = arith.constant 0 : i32
    %c0_i32_0 = arith.constant 0 : i32
    return %arg1, %arg0, %c0_i32 : i32, i32, i32
  }
  func.func @transform_1(%arg0: i32, %arg1: i32) -> (i32, i32, i32) {
    %c0_i32 = arith.constant 0 : i32
    %c0_i32_0 = arith.constant 0 : i32
    %c0_i32_1 = arith.constant 0 : i32
    return %c0_i32, %arg0, %c0_i32_0 : i32, i32, i32
  }
  func.func @transform_2(%arg0: i32, %arg1: i32) -> (i32, i32, i32) {
    %c0_i32 = arith.constant 0 : i32
    %c0_i32_0 = arith.constant 0 : i32
    %c0_i32_1 = arith.constant 0 : i32
    return %c0_i32, %arg0, %c0_i32_0 : i32, i32, i32
  }
  func.func @transform_3(%arg0: i32, %arg1: i32) -> (i32, i32) {
    %c0_i32 = arith.constant 0 : i32
    %c0_i32_0 = arith.constant 0 : i32
    %c0_i32_1 = arith.constant 0 : i32
    return %c0_i32, %c0_i32_0 : i32, i32
  }
  func.func @transform_4(%arg0: i32, %arg1: i32) -> (i32, i32) {
    %c0_i32 = arith.constant 0 : i32
    %c0_i32_0 = arith.constant 0 : i32
    %c0_i32_1 = arith.constant 0 : i32
    return %c0_i32, %c0_i32_0 : i32, i32
  }
  func.func @transform_5(%arg0: i32, %arg1: i32) -> (i32, i32) {
    %c0_i32 = arith.constant 0 : i32
    %c0_i32_0 = arith.constant 0 : i32
    %c0_i32_1 = arith.constant 0 : i32
    return %c0_i32, %c0_i32_0 : i32, i32
  }
  func.func @transform_6(%arg0: i32, %arg1: i32) -> (i32, i32) {
    %c0_i32 = arith.constant 0 : i32
    %c0_i32_0 = arith.constant 0 : i32
    %c0_i32_1 = arith.constant 0 : i32
    return %c0_i32, %c0_i32_0 : i32, i32
  }
  func.func @transform_7(%arg0: i32, %arg1: i32) -> (i32, i32) {
    %c0_i32 = arith.constant 0 : i32
    %c0_i32_0 = arith.constant 0 : i32
    %c0_i32_1 = arith.constant 0 : i32
    return %c0_i32, %c0_i32_0 : i32, i32
  }
  func.func @transform_8(%arg0: i32, %arg1: i32) -> (i32, i32, i32) {
    %c0_i32 = arith.constant 0 : i32
    %c0_i32_0 = arith.constant 0 : i32
    return %arg1, %arg0, %c0_i32 : i32, i32, i32
  }
  func.func @transform_9(%arg0: i32, %arg1: i32) -> (i32, i32, i32) {
    %c0_i32 = arith.constant 0 : i32
    %c0_i32_0 = arith.constant 0 : i32
    %c0_i32_1 = arith.constant 0 : i32
    return %c0_i32, %arg0, %c0_i32_0 : i32, i32, i32
  }
  func.func @transform_10(%arg0: i32, %arg1: i32) -> (i32, i32, i32) {
    %c0_i32 = arith.constant 0 : i32
    %c0_i32_0 = arith.constant 0 : i32
    %c0_i32_1 = arith.constant 0 : i32
    return %c0_i32, %arg0, %c0_i32_0 : i32, i32, i32
  }
}

</mosaic_0001>

<llo_original>
// kernel: tpu_custom_call.1
$region0: #{tpu_custom_call.1}
  #allocation0 [shape = 'u32[]', space=smem, size = 0x4, offset = 0x4, fixed_abs, tag = 'smem constant byte address 0x4 - core index']
  #allocation1 [shape = 'u32[72,128]{1,0:T(1,128)}', space=vmem, size = 0x9000, scoped, tag = 'internal scratch']
  #allocation2 [shape = 'f32[8,32]{1,0:T(8,128)}', space=vmem, size = 0x1000, scoped, tag = 'scratch operand']
  #allocation3 [shape = 'f32[8,32]{1,0:T(8,128)}', space=vmem, size = 0x1000, scoped, tag = 'scratch operand']
  #allocation4 [shape = 'f32[8,8,128]{2,1,0:T(8,128)}', space=vmem, size = 0x8000, scoped, tag = 'scratch operand']
  #allocation5 [shape = 'f32[8,8,32]{2,1,0:T(8,128)}', space=vmem, size = 0x8000, scoped, tag = 'scratch operand']
  %s0 = inlined_call_operand.hbm [shape: f32[8,8,16], index: 0, kind: input, shape index: {}]
  %s1 = inlined_call_operand.hbm [shape: f32[1,8,32], index: 1, kind: input, shape index: {}]
  %s2 = inlined_call_operand.hbm [shape: f32[1,8,32], index: 2, kind: input, shape index: {}]
  %s3 = inlined_call_operand.hbm [shape: bf16[16,128], index: 3, kind: input, shape index: {}]
  %s4 = inlined_call_operand.vmem [shape: f32[1,128], index: 4, kind: input, shape index: {}]
  %s5 = inlined_call_operand.vmem [shape: bf16[32,128], index: 5, kind: input, shape index: {}]
  %s6 = inlined_call_operand.vmem [shape: bf16[32,8], index: 6, kind: input, shape index: {}]
  %s7 = inlined_call_operand.vmem [shape: f32[1,8], index: 7, kind: input, shape index: {}]
  %s8 = inlined_call_operand.hbm [shape: f32[8,8,8], index: 8, kind: output, shape index: {0}]
  %s9 = inlined_call_operand.hbm [shape: f32[1,8,32], index: 9, kind: output, shape index: {1}]
  %s10 = inlined_call_operand.hbm [shape: f32[1,8,32], index: 10, kind: output, shape index: {2}]
  %11 = xla_tuple %s8, %s9, %s10
  %s12 = sld [smem:[#allocation0]]
  $region82: #{tpu_custom_call.1} parent=0
    _
  %s14 = ssub.s32 1, %s12
  %s15 = scalar_select 0, %s14, %s12
  $region1: #{tpu_custom_call.1} parent=0
    #allocation6 [shape = 'u8[32768]{0}', space=vmem, size = 0x8000, scoped, tag = 'input window, operand 0, single buffered']
    #allocation7 [shape = 's32[1]{0}', space=sflag, size = 0x4, scoped, tag = 'scoped memory for tpu_custom_call.1']
    #allocation8 [shape = 's32[1]{0}', space=sflag, size = 0x4, scoped, tag = 'scoped memory for tpu_custom_call.1']
    #allocation9 [shape = 'u8[4096]{0}', space=vmem, size = 0x1000, scoped, tag = 'input window, operand 1, single buffered']
    #allocation10 [shape = 's32[1]{0}', space=sflag, size = 0x4, scoped, tag = 'scoped memory for tpu_custom_call.1']
    #allocation11 [shape = 'u8[4096]{0}', space=vmem, size = 0x1000, scoped, tag = 'input window, operand 2, single buffered']
    #allocation12 [shape = 'u8[4096]{0}', space=vmem, size = 0x1000, scoped, tag = 'input window, operand 3, single buffered']
    #allocation13 [shape = 's32[1]{0}', space=sflag, size = 0x4, scoped, tag = 'scoped memory for tpu_custom_call.1']
    #allocation14 [shape = 'u8[32768]{0}', space=vmem, size = 0x8000, scoped, tag = 'output window, operand 0, single buffered']
    #allocation15 [shape = 'u8[4096]{0}', space=vmem, size = 0x1000, scoped, tag = 'output window, operand 1, single buffered']
    #allocation16 [shape = 's32[1]{0}', space=sflag, size = 0x4, scoped, tag = 'scoped memory for tpu_custom_call.1']
    #allocation17 [shape = 'u8[4096]{0}', space=vmem, size = 0x1000, scoped, tag = 'output window, operand 2, single buffered']
    %16 = vsyncpa [#allocation7], 0
    %17 = vsyncpa [#allocation10], 0
    %18 = vsyncpa [#allocation13], 0
    %19 = vsyncpa [#allocation8], 0
    %20 = vsyncpa [#allocation16], 0
    // Predicated region
    $region2: #{tpu_custom_call.1} parent=1 // pred_check
      _
    $region3: #{tpu_custom_call.1} parent=1 // pred_check_branch
      %22 = sbr.rel (0) target = $region5
    $region4: #{tpu_custom_call.1} parent=1 // pred_region
      %24 = vsyncadd [#allocation7], 0
      %s25 = sshll.u32 %s0, 4
      %s26 = int_to_ptr.hbm [resolvable:$true] %s25
      %s27 = sshll.u32 [#allocation6], 4
      %s28 = int_to_ptr.vmem [resolvable:$true] %s27
      %33 = dma.hbm_to_vmem [thread:$0]  %s26, 1024, %s28, [#allocation7], 128, 128, 8
    $region5: #{tpu_custom_call.1} parent=1 // pred_fallthru
      _
    // Predicated region
    $region6: #{tpu_custom_call.1} parent=1 // pred_check
      _
    $region7: #{tpu_custom_call.1} parent=1 // pred_check_branch
      %35 = sbr.rel (0) target = $region9
    $region8: #{tpu_custom_call.1} parent=1 // pred_region
      %37 = vsyncadd [#allocation10], 0
      %s39 = sshll.u32 %s1, 4
      %s40 = int_to_ptr.hbm [resolvable:$true] %s39
      %s41 = sshll.u32 [#allocation9], 4
      %s42 = int_to_ptr.vmem [resolvable:$true] %s41
      %44 = dma.hbm_to_vmem [thread:$0]  %s40, 128, %s42, [#allocation10]
    $region9: #{tpu_custom_call.1} parent=1 // pred_fallthru
      _
    // Predicated region
    $region10: #{tpu_custom_call.1} parent=1 // pred_check
      _
    $region11: #{tpu_custom_call.1} parent=1 // pred_check_branch
      %46 = sbr.rel (0) target = $region13
    $region12: #{tpu_custom_call.1} parent=1 // pred_region
      %48 = vsyncadd [#allocation10], 0
      %s50 = sshll.u32 %s2, 4
      %s51 = int_to_ptr.hbm [resolvable:$true] %s50
      %s52 = sshll.u32 [#allocation11], 4
      %s53 = int_to_ptr.vmem [resolvable:$true] %s52
      %55 = dma.hbm_to_vmem [thread:$0]  %s51, 128, %s53, [#allocation10]
    $region13: #{tpu_custom_call.1} parent=1 // pred_fallthru
      _
    // Predicated region
    $region14: #{tpu_custom_call.1} parent=1 // pred_check
      _
    $region15: #{tpu_custom_call.1} parent=1 // pred_check_branch
      %57 = sbr.rel (0) target = $region17
    $region16: #{tpu_custom_call.1} parent=1 // pred_region
      %59 = vsyncadd [#allocation13], 0
      %s60 = sshll.u32 %s3, 4
      %s61 = int_to_ptr.hbm [resolvable:$true] %s60
      %s62 = sshll.u32 [#allocation12], 4
      %s63 = int_to_ptr.vmem [resolvable:$true] %s62
      %68 = dma.hbm_to_vmem [thread:$0]  %s61, 128, %s63, [#allocation13], 64, 64, 4
    $region17: #{tpu_custom_call.1} parent=1 // pred_fallthru
      _
    // Predicated region
    $region18: #{tpu_custom_call.1} parent=1 // pred_check
      _
    $region19: #{tpu_custom_call.1} parent=1 // pred_check_branch
      %70 = sbr.rel (0) target = $region21
    $region20: #{tpu_custom_call.1} parent=1 // pred_region
      _
    $region21: #{tpu_custom_call.1} parent=1 // pred_fallthru
      _
    // Predicated region
    $region22: #{tpu_custom_call.1} parent=1 // pred_check
      _
    $region23: #{tpu_custom_call.1} parent=1 // pred_check_branch
      %72 = sbr.rel (0) target = $region25
    $region24: #{tpu_custom_call.1} parent=1 // pred_region
      _
    $region25: #{tpu_custom_call.1} parent=1 // pred_fallthru
      _
    // Predicated region
    $region26: #{tpu_custom_call.1} parent=1 // pred_check
      _
    $region27: #{tpu_custom_call.1} parent=1 // pred_check_branch
      %74 = sbr.rel (0) target = $region29
    $region28: #{tpu_custom_call.1} parent=1 // pred_region
      _
    $region29: #{tpu_custom_call.1} parent=1 // pred_fallthru
      _
    // Predicated region
    $region30: #{tpu_custom_call.1} parent=1 // pred_check
      _
    $region31: #{tpu_custom_call.1} parent=1 // pred_check_branch
      %76 = sbr.rel (0) target = $region33
    $region32: #{tpu_custom_call.1} parent=1 // pred_region
      _
    $region33: #{tpu_custom_call.1} parent=1 // pred_fallthru
      _
    // Predicated region
    $region34: #{tpu_custom_call.1} parent=1 // pred_check
      _
    $region35: #{tpu_custom_call.1} parent=1 // pred_check_branch
      %78 = sbr.rel (0) target = $region37
    $region36: #{tpu_custom_call.1} parent=1 // pred_region
      %80 = dma.done [#allocation7], 1024
    $region37: #{tpu_custom_call.1} parent=1 // pred_fallthru
      _
    // Predicated region
    $region38: #{tpu_custom_call.1} parent=1 // pred_check
      _
    $region39: #{tpu_custom_call.1} parent=1 // pred_check_branch
      %82 = sbr.rel (0) target = $region41
    $region40: #{tpu_custom_call.1} parent=1 // pred_region
      %84 = dma.done [#allocation10], 128
    $region41: #{tpu_custom_call.1} parent=1 // pred_fallthru
      _
    // Predicated region
    $region42: #{tpu_custom_call.1} parent=1 // pred_check
      _
    $region43: #{tpu_custom_call.1} parent=1 // pred_check_branch
      %86 = sbr.rel (0) target = $region45
    $region44: #{tpu_custom_call.1} parent=1 // pred_region
      %88 = dma.done [#allocation10], 128
    $region45: #{tpu_custom_call.1} parent=1 // pred_fallthru
      _
    // Predicated region
    $region46: #{tpu_custom_call.1} parent=1 // pred_check
      _
    $region47: #{tpu_custom_call.1} parent=1 // pred_check_branch
      %90 = sbr.rel (0) target = $region49
    $region48: #{tpu_custom_call.1} parent=1 // pred_region
      %92 = dma.done [#allocation13], 128
    $region49: #{tpu_custom_call.1} parent=1 // pred_fallthru
      _
    %p94 = scmp.eq.s32.totalorder 0, 0
    // Predicated region
    $region50: #{tpu_custom_call.1} parent=1 // pred_check
      %p95 = pneg %p94
    $region51: #{tpu_custom_call.1} parent=1 // pred_check_branch
      %97 = sbr.rel (%p95) target = $region53
    $region52: #{tpu_custom_call.1} parent=1 // pred_region
      %v98 = vld [vmem:[#allocation9] sm:$0xff]
      %vm99 = vcmask 261120
      %100 = vst.msk [vmem:[#allocation2] sm:$0xff] %vm99, %v98
      %v101 = vld [vmem:[#allocation11] sm:$0xff]
      %102 = vst.msk [vmem:[#allocation3] sm:$0xff] %vm99, %v101
    $region53: #{tpu_custom_call.1} parent=1 // pred_fallthru
      _
    %v103 = vld [vmem:[#allocation6] sm:$0xff]
    %v104 = vld [vmem:[#allocation6 + $0x8] sm:$0xff]
    %v105 = vld [vmem:[#allocation6 + $0x10] sm:$0xff]
    %v106 = vld [vmem:[#allocation6 + $0x18] sm:$0xff]
    %v107 = vld [vmem:[#allocation6 + $0x20] sm:$0xff]
    %v108 = vld [vmem:[#allocation6 + $0x28] sm:$0xff]
    %v109 = vld [vmem:[#allocation6 + $0x30] sm:$0xff]
    %v110 = vld [vmem:[#allocation6 + $0x38] sm:$0xff]
    %v111 = vpack.c.bf16 %v104, %v103
    %v112 = vpack.c.bf16 %v106, %v105
    %v113 = vpack.c.bf16 %v108, %v107
    %v114 = vpack.c.bf16 %v110, %v109
    %v115 = vld [vmem:[#allocation12] sm:$0xf]
    %v116 = vld [vmem:[#allocation12 + $0x4] sm:$0xf]
    %v117 = vld [vmem:[%s4] sm:$0x1]
    %v119 = vperm.slane %v117, 0
    %v123 = vunpack.c.l.b16 %v115
    %v124 = vunpack.c.l.b16 %v116
    %v125 = vpack.c.b16 %v124, %v123
    %vm127 = vcmask 130048
    %v129 = vsel %vm127, %v111, 0
    %v132 = vsel %vm127, %v112, 0
    %v135 = vsel %vm127, %v113, 0
    %v138 = vsel %vm127, %v114, 0
    %140 = vmatpush.bf16.msra.mxu0 0
    %141 = vmatpush.bf16.msra.mxu0 0
    %142 = vmatpush.bf16.msra.mxu0 0
    %143 = vmatpush.bf16.msra.mxu0 0
    %144 = vmatpush.bf16.msra.mxu0 0
    %145 = vmatpush.bf16.msra.mxu0 0
    %146 = vmatpush.bf16.msra.mxu0 0
    %147 = vmatpush.bf16.msra.mxu0 %v125
    %148 = vmatmul.bf16.gmra.mxu0 %v129
    %v149 = vpop.f32.mrf.mxu0
    %v150 = vadd.f32 %v119, %v149
    %v151 = vpop.f32.mrf.mxu0
    %v152 = vadd.f32 %v119, %v151
    %153 = vmatmul.bf16.gmra.mxu0 %v132
    %v154 = vpop.f32.mrf.mxu0
    %v155 = vadd.f32 %v119, %v154
    %v156 = vpop.f32.mrf.mxu0
    %v157 = vadd.f32 %v119, %v156
    %158 = vmatmul.bf16.gmra.mxu0 %v135
    %v159 = vpop.f32.mrf.mxu0
    %v160 = vadd.f32 %v119, %v159
    %v161 = vpop.f32.mrf.mxu0
    %v162 = vadd.f32 %v119, %v161
    %163 = vmatmul.bf16.gmra.mxu0 %v138
    %v164 = vpop.f32.mrf.mxu0
    %v165 = vadd.f32 %v119, %v164
    %v166 = vpop.f32.mrf.mxu0
    %v167 = vadd.f32 %v119, %v166
    %168 = vdwg.mxu0
    %169 = vst [vmem:[#allocation4] sm:$0xff] %v150
    %170 = vst [vmem:[#allocation4 + $0x8] sm:$0xff] %v152
    %171 = vst [vmem:[#allocation4 + $0x10] sm:$0xff] %v155
    %172 = vst [vmem:[#allocation4 + $0x18] sm:$0xff] %v157
    %173 = vst [vmem:[#allocation4 + $0x20] sm:$0xff] %v160
    %174 = vst [vmem:[#allocation4 + $0x28] sm:$0xff] %v162
    %175 = vst [vmem:[#allocation4 + $0x30] sm:$0xff] %v165
    %176 = vst [vmem:[#allocation4 + $0x38] sm:$0xff] %v167
    %v177 = vld [vmem:[%s5] sm:$0xf]
    %v178 = vld [vmem:[%s5 + $0x4] sm:$0xf]
    %v179 = vld [vmem:[%s5 + $0x8] sm:$0xf]
    %v180 = vld [vmem:[%s5 + $0xc] sm:$0xf]
    %v181 = vld [vmem:[#allocation2] sm:$0xff]
    %v182 = vld [vmem:[#allocation3] sm:$0xff]
    %v183 = vld [vmem:[#allocation4] sm:$0xff]
    %v184 = vpack.c.bf16 %v181, %v181
    %v189 = vunpack.c.l.b16 %v177
    %v190 = vunpack.c.l.b16 %v178
    %v191 = vunpack.c.l.b16 %v179
    %v192 = vunpack.c.l.b16 %v180
    %v193 = vpack.c.b16 %v190, %v189
    %v194 = vpack.c.b16 %v192, %v191
    %vm197 = vcmask 261120
    %v199 = vsel %vm197, %v184, 0
    %201 = vmatpush.bf16.msra.mxu0 0
    %202 = vmatpush.bf16.msra.mxu0 0
    %203 = vmatpush.bf16.msra.mxu0 0
    %204 = vmatpush.bf16.msra.mxu0 0
    %205 = vmatpush.bf16.msra.mxu0 0
    %206 = vmatpush.bf16.msra.mxu0 0
    %207 = vmatpush.bf16.msra.mxu0 %v194
    %208 = vmatpush.bf16.msra.mxu0 %v193
    %209 = vmatmul.bf16.gmra.mxu0 %v199
    %v210 = vpop.f32.mrf.mxu0
    %v211 = vadd.f32 0.0, %v210
    %v212 = vpop.f32.mrf.mxu0
    %213 = vdwg.mxu0
    %v214 = vadd.f32 %v183, %v211
    %v215 = vxor.u32 %v214, 2147483648
    %v216 = vmul.f32 %v215, 1.442695
    %v217 = vpow.pop %v216
    %v218 = vadd.f32 %v217, 1.0
    %v219 = vrcp.pop %v218
    %v220 = vmul.f32 %v218, %v219
    %v221 = vsub.f32 1.0, %v220
    %v222 = vmul.f32 %v219, %v221
    %v223 = vadd.f32 %v219, %v222
    %vm224 = vweird.f32 %v218
    %vm225 = vweird.f32 %v219
    %vm226 = vmor %vm224, %vm225
    %v227 = vsel %vm226, %v219, %v223
    %v228 = vand.u32 2147483647, %v218
    %vm229 = vcmp.eq.f32.partialorder %v228, 8.507059e+37
    %v230 = vand.u32 %v218, 2147483648
    %v231 = vor.u32 1.1754944e-38, %v230
    %v232 = vsel %vm229, %v231, %v227
    %v233 = vmul.f32 1.0, %v232
    %v234 = vtanh.pop %v214
    %236 = vrot.lane.b32.xlu0 %v182, 32
    %v237 = vpop.permute.xlu0 %236
    %v239 = vmul.f32 %v233, %v237
    %241 = vrot.lane.b32.xlu0 %v234, 64
    %v242 = vpop.permute.xlu0 %241
    %v244 = vmul.f32 %v233, %v242
    %246 = vrot.lane.b32.xlu0 %v244, 32
    %v247 = vpop.permute.xlu0 %246
    %v249 = vadd.f32 %v239, %v247
    %v250 = vtanh.pop %v249
    %252 = vrot.lane.b32.xlu0 %v250, 64
    %v253 = vpop.permute.xlu0 %252
    %v255 = vmul.f32 %v233, %v253
    %257 = vrot.lane.b32.xlu0 %v255, 32
    %v258 = vpop.permute.xlu0 %257
    %260 = vst.msk [vmem:[#allocation5] sm:$0xff] %vm197, %v258
    %s261 = scalar_lea.vmem [#allocation4], 8
    %v262 = vld [vmem:[%s261] sm:$0xff]
    %v263 = vpack.c.bf16 %v255, %v255
    %265 = vrot.lane.b32.xlu0 %v263, 32
    %v266 = vpop.permute.xlu0 %265
    %v268 = vsel %vm197, %v266, 0
    %270 = vmatpush.bf16.msra.mxu0 0
    %271 = vmatpush.bf16.msra.mxu0 0
    %272 = vmatpush.bf16.msra.mxu0 0
    %273 = vmatpush.bf16.msra.mxu0 0
    %274 = vmatpush.bf16.msra.mxu0 0
    %275 = vmatpush.bf16.msra.mxu0 0
    %276 = vmatpush.bf16.msra.mxu0 %v194
    %277 = vmatpush.bf16.msra.mxu0 %v193
    %278 = vmatmul.bf16.gmra.mxu0 %v268
    %v279 = vpop.f32.mrf.mxu0
    %v280 = vadd.f32 0.0, %v279
    %v281 = vpop.f32.mrf.mxu0
    %282 = vdwg.mxu0
    %v283 = vadd.f32 %v262, %v280
    %v284 = vxor.u32 %v283, 2147483648
    %v285 = vmul.f32 %v284, 1.442695
    %v286 = vpow.pop %v285
    %v287 = vadd.f32 %v286, 1.0
    %v288 = vrcp.pop %v287
    %v289 = vmul.f32 %v287, %v288
    %v290 = vsub.f32 1.0, %v289
    %v291 = vmul.f32 %v288, %v290
    %v292 = vadd.f32 %v288, %v291
    %vm293 = vweird.f32 %v287
    %vm294 = vweird.f32 %v288
    %vm295 = vmor %vm293, %vm294
    %v296 = vsel %vm295, %v288, %v292
    %v297 = vand.u32 2147483647, %v287
    %vm298 = vcmp.eq.f32.partialorder %v297, 8.507059e+37
    %v299 = vand.u32 %v287, 2147483648
    %v300 = vor.u32 1.1754944e-38, %v299
    %v301 = vsel %vm298, %v300, %v296
    %v302 = vmul.f32 1.0, %v301
    %v303 = vtanh.pop %v283
    %v304 = vmul.f32 %v302, %v249
    %306 = vrot.lane.b32.xlu0 %v303, 64
    %v307 = vpop.permute.xlu0 %306
    %v309 = vmul.f32 %v302, %v307
    %311 = vrot.lane.b32.xlu0 %v309, 32
    %v312 = vpop.permute.xlu0 %311
    %v314 = vadd.f32 %v304, %v312
    %v315 = vtanh.pop %v314
    %317 = vrot.lane.b32.xlu0 %v315, 64
    %v318 = vpop.permute.xlu0 %317
    %v320 = vmul.f32 %v302, %v318
    %322 = vrot.lane.b32.xlu0 %v320, 32
    %v323 = vpop.permute.xlu0 %322
    %s325 = scalar_lea.vmem [#allocation5], 8
    %326 = vst.msk [vmem:[%s325] sm:$0xff] %vm197, %v323
    %s327 = scalar_lea.vmem [#allocation4], 16
    %v328 = vld [vmem:[%s327] sm:$0xff]
    %v329 = vpack.c.bf16 %v320, %v320
    %331 = vrot.lane.b32.xlu0 %v329, 32
    %v332 = vpop.permute.xlu0 %331
    %v334 = vsel %vm197, %v332, 0
    %336 = vmatpush.bf16.msra.mxu0 0
    %337 = vmatpush.bf16.msra.mxu0 0
    %338 = vmatpush.bf16.msra.mxu0 0
    %339 = vmatpush.bf16.msra.mxu0 0
    %340 = vmatpush.bf16.msra.mxu0 0
    %341 = vmatpush.bf16.msra.mxu0 0
    %342 = vmatpush.bf16.msra.mxu0 %v194
    %343 = vmatpush.bf16.msra.mxu0 %v193
    %344 = vmatmul.bf16.gmra.mxu0 %v334
    %v345 = vpop.f32.mrf.mxu0
    %v346 = vadd.f32 0.0, %v345
    %v347 = vpop.f32.mrf.mxu0
    %348 = vdwg.mxu0
    %v349 = vadd.f32 %v328, %v346
    %v350 = vxor.u32 %v349, 2147483648
    %v351 = vmul.f32 %v350, 1.442695
    %v352 = vpow.pop %v351
    %v353 = vadd.f32 %v352, 1.0
    %v354 = vrcp.pop %v353
    %v355 = vmul.f32 %v353, %v354
    %v356 = vsub.f32 1.0, %v355
    %v357 = vmul.f32 %v354, %v356
    %v358 = vadd.f32 %v354, %v357
    %vm359 = vweird.f32 %v353
    %vm360 = vweird.f32 %v354
    %vm361 = vmor %vm359, %vm360
    %v362 = vsel %vm361, %v354, %v358
    %v363 = vand.u32 2147483647, %v353
    %vm364 = vcmp.eq.f32.partialorder %v363, 8.507059e+37
    %v365 = vand.u32 %v353, 2147483648
    %v366 = vor.u32 1.1754944e-38, %v365
    %v367 = vsel %vm364, %v366, %v362
    %v368 = vmul.f32 1.0, %v367
    %v369 = vtanh.pop %v349
    %v370 = vmul.f32 %v368, %v314
    %372 = vrot.lane.b32.xlu0 %v369, 64
    %v373 = vpop.permute.xlu0 %372
    %v375 = vmul.f32 %v368, %v373
    %377 = vrot.lane.b32.xlu0 %v375, 32
    %v378 = vpop.permute.xlu0 %377
    %v380 = vadd.f32 %v370, %v378
    %v381 = vtanh.pop %v380
    %383 = vrot.lane.b32.xlu0 %v381, 64
    %v384 = vpop.permute.xlu0 %383
    %v386 = vmul.f32 %v368, %v384
    %388 = vrot.lane.b32.xlu0 %v386, 32
    %v389 = vpop.permute.xlu0 %388
    %s391 = scalar_lea.vmem [#allocation5], 16
    %392 = vst.msk [vmem:[%s391] sm:$0xff] %vm197, %v389
    %s393 = scalar_lea.vmem [#allocation4], 24
    %v394 = vld [vmem:[%s393] sm:$0xff]
    %v395 = vpack.c.bf16 %v386, %v386
    %397 = vrot.lane.b32.xlu0 %v395, 32
    %v398 = vpop.permute.xlu0 %397
    %v400 = vsel %vm197, %v398, 0
    %402 = vmatpush.bf16.msra.mxu0 0
    %403 = vmatpush.bf16.msra.mxu0 0
    %404 = vmatpush.bf16.msra.mxu0 0
    %405 = vmatpush.bf16.msra.mxu0 0
    %406 = vmatpush.bf16.msra.mxu0 0
    %407 = vmatpush.bf16.msra.mxu0 0
    %408 = vmatpush.bf16.msra.mxu0 %v194
    %409 = vmatpush.bf16.msra.mxu0 %v193
    %410 = vmatmul.bf16.gmra.mxu0 %v400
    %v411 = vpop.f32.mrf.mxu0
    %v412 = vadd.f32 0.0, %v411
    %v413 = vpop.f32.mrf.mxu0
    %414 = vdwg.mxu0
    %v415 = vadd.f32 %v394, %v412
    %v416 = vxor.u32 %v415, 2147483648
    %v417 = vmul.f32 %v416, 1.442695
    %v418 = vpow.pop %v417
    %v419 = vadd.f32 %v418, 1.0
    %v420 = vrcp.pop %v419
    %v421 = vmul.f32 %v419, %v420
    %v422 = vsub.f32 1.0, %v421
    %v423 = vmul.f32 %v420, %v422
    %v424 = vadd.f32 %v420, %v423
    %vm425 = vweird.f32 %v419
    %vm426 = vweird.f32 %v420
    %vm427 = vmor %vm425, %vm426
    %v428 = vsel %vm427, %v420, %v424
    %v429 = vand.u32 2147483647, %v419
    %vm430 = vcmp.eq.f32.partialorder %v429, 8.507059e+37
    %v431 = vand.u32 %v419, 2147483648
    %v432 = vor.u32 1.1754944e-38, %v431
    %v433 = vsel %vm430, %v432, %v428
    %v434 = vmul.f32 1.0, %v433
    %v435 = vtanh.pop %v415
    %v436 = vmul.f32 %v434, %v380
    %438 = vrot.lane.b32.xlu0 %v435, 64
    %v439 = vpop.permute.xlu0 %438
    %v441 = vmul.f32 %v434, %v439
    %443 = vrot.lane.b32.xlu0 %v441, 32
    %v444 = vpop.permute.xlu0 %443
    %v446 = vadd.f32 %v436, %v444
    %v447 = vtanh.pop %v446
    %449 = vrot.lane.b32.xlu0 %v447, 64
    %v450 = vpop.permute.xlu0 %449
    %v452 = vmul.f32 %v434, %v450
    %454 = vrot.lane.b32.xlu0 %v452, 32
    %v455 = vpop.permute.xlu0 %454
    %s457 = scalar_lea.vmem [#allocation5], 24
    %458 = vst.msk [vmem:[%s457] sm:$0xff] %vm197, %v455
    %s459 = scalar_lea.vmem [#allocation4], 32
    %v460 = vld [vmem:[%s459] sm:$0xff]
    %v461 = vpack.c.bf16 %v452, %v452
    %463 = vrot.lane.b32.xlu0 %v461, 32
    %v464 = vpop.permute.xlu0 %463
    %v466 = vsel %vm197, %v464, 0
    %468 = vmatpush.bf16.msra.mxu0 0
    %469 = vmatpush.bf16.msra.mxu0 0
    %470 = vmatpush.bf16.msra.mxu0 0
    %471 = vmatpush.bf16.msra.mxu0 0
    %472 = vmatpush.bf16.msra.mxu0 0
    %473 = vmatpush.bf16.msra.mxu0 0
    %474 = vmatpush.bf16.msra.mxu0 %v194
    %475 = vmatpush.bf16.msra.mxu0 %v193
    %476 = vmatmul.bf16.gmra.mxu0 %v466
    %v477 = vpop.f32.mrf.mxu0
    %v478 = vadd.f32 0.0, %v477
    %v479 = vpop.f32.mrf.mxu0
    %480 = vdwg.mxu0
    %v481 = vadd.f32 %v460, %v478
    %v482 = vxor.u32 %v481, 2147483648
    %v483 = vmul.f32 %v482, 1.442695
    %v484 = vpow.pop %v483
    %v485 = vadd.f32 %v484, 1.0
    %v486 = vrcp.pop %v485
    %v487 = vmul.f32 %v485, %v486
    %v488 = vsub.f32 1.0, %v487
    %v489 = vmul.f32 %v486, %v488
    %v490 = vadd.f32 %v486, %v489
    %vm491 = vweird.f32 %v485
    %vm492 = vweird.f32 %v486
    %vm493 = vmor %vm491, %vm492
    %v494 = vsel %vm493, %v486, %v490
    %v495 = vand.u32 2147483647, %v485
    %vm496 = vcmp.eq.f32.partialorder %v495, 8.507059e+37
    %v497 = vand.u32 %v485, 2147483648
    %v498 = vor.u32 1.1754944e-38, %v497
    %v499 = vsel %vm496, %v498, %v494
    %v500 = vmul.f32 1.0, %v499
    %v501 = vtanh.pop %v481
    %v502 = vmul.f32 %v500, %v446
    %504 = vrot.lane.b32.xlu0 %v501, 64
    %v505 = vpop.permute.xlu0 %504
    %v507 = vmul.f32 %v500, %v505
    %509 = vrot.lane.b32.xlu0 %v507, 32
    %v510 = vpop.permute.xlu0 %509
    %v512 = vadd.f32 %v502, %v510
    %v513 = vtanh.pop %v512
    %515 = vrot.lane.b32.xlu0 %v513, 64
    %v516 = vpop.permute.xlu0 %515
    %v518 = vmul.f32 %v500, %v516
    %520 = vrot.lane.b32.xlu0 %v518, 32
    %v521 = vpop.permute.xlu0 %520
    %s523 = scalar_lea.vmem [#allocation5], 32
    %524 = vst.msk [vmem:[%s523] sm:$0xff] %vm197, %v521
    %s525 = scalar_lea.vmem [#allocation4], 40
    %v526 = vld [vmem:[%s525] sm:$0xff]
    %v527 = vpack.c.bf16 %v518, %v518
    %529 = vrot.lane.b32.xlu0 %v527, 32
    %v530 = vpop.permute.xlu0 %529
    %v532 = vsel %vm197, %v530, 0
    %534 = vmatpush.bf16.msra.mxu0 0
    %535 = vmatpush.bf16.msra.mxu0 0
    %536 = vmatpush.bf16.msra.mxu0 0
    %537 = vmatpush.bf16.msra.mxu0 0
    %538 = vmatpush.bf16.msra.mxu0 0
    %539 = vmatpush.bf16.msra.mxu0 0
    %540 = vmatpush.bf16.msra.mxu0 %v194
    %541 = vmatpush.bf16.msra.mxu0 %v193
    %542 = vmatmul.bf16.gmra.mxu0 %v532
    %v543 = vpop.f32.mrf.mxu0
    %v544 = vadd.f32 0.0, %v543
    %v545 = vpop.f32.mrf.mxu0
    %546 = vdwg.mxu0
    %v547 = vadd.f32 %v526, %v544
    %v548 = vxor.u32 %v547, 2147483648
    %v549 = vmul.f32 %v548, 1.442695
    %v550 = vpow.pop %v549
    %v551 = vadd.f32 %v550, 1.0
    %v552 = vrcp.pop %v551
    %v553 = vmul.f32 %v551, %v552
    %v554 = vsub.f32 1.0, %v553
    %v555 = vmul.f32 %v552, %v554
    %v556 = vadd.f32 %v552, %v555
    %vm557 = vweird.f32 %v551
    %vm558 = vweird.f32 %v552
    %vm559 = vmor %vm557, %vm558
    %v560 = vsel %vm559, %v552, %v556
    %v561 = vand.u32 2147483647, %v551
    %vm562 = vcmp.eq.f32.partialorder %v561, 8.507059e+37
    %v563 = vand.u32 %v551, 2147483648
    %v564 = vor.u32 1.1754944e-38, %v563
    %v565 = vsel %vm562, %v564, %v560
    %v566 = vmul.f32 1.0, %v565
    %v567 = vtanh.pop %v547
    %v568 = vmul.f32 %v566, %v512
    %570 = vrot.lane.b32.xlu0 %v567, 64
    %v571 = vpop.permute.xlu0 %570
    %v573 = vmul.f32 %v566, %v571
    %575 = vrot.lane.b32.xlu0 %v573, 32
    %v576 = vpop.permute.xlu0 %575
    %v578 = vadd.f32 %v568, %v576
    %v579 = vtanh.pop %v578
    %581 = vrot.lane.b32.xlu0 %v579, 64
    %v582 = vpop.permute.xlu0 %581
    %v584 = vmul.f32 %v566, %v582
    %586 = vrot.lane.b32.xlu0 %v584, 32
    %v587 = vpop.permute.xlu0 %586
    %s589 = scalar_lea.vmem [#allocation5], 40
    %590 = vst.msk [vmem:[%s589] sm:$0xff] %vm197, %v587
    %s591 = scalar_lea.vmem [#allocation4], 48
    %v592 = vld [vmem:[%s591] sm:$0xff]
    %v593 = vpack.c.bf16 %v584, %v584
    %595 = vrot.lane.b32.xlu0 %v593, 32
    %v596 = vpop.permute.xlu0 %595
    %v598 = vsel %vm197, %v596, 0
    %600 = vmatpush.bf16.msra.mxu0 0
    %601 = vmatpush.bf16.msra.mxu0 0
    %602 = vmatpush.bf16.msra.mxu0 0
    %603 = vmatpush.bf16.msra.mxu0 0
    %604 = vmatpush.bf16.msra.mxu0 0
    %605 = vmatpush.bf16.msra.mxu0 0
    %606 = vmatpush.bf16.msra.mxu0 %v194
    %607 = vmatpush.bf16.msra.mxu0 %v193
    %608 = vmatmul.bf16.gmra.mxu0 %v598
    %v609 = vpop.f32.mrf.mxu0
    %v610 = vadd.f32 0.0, %v609
    %v611 = vpop.f32.mrf.mxu0
    %612 = vdwg.mxu0
    %v613 = vadd.f32 %v592, %v610
    %v614 = vxor.u32 %v613, 2147483648
    %v615 = vmul.f32 %v614, 1.442695
    %v616 = vpow.pop %v615
    %v617 = vadd.f32 %v616, 1.0
    %v618 = vrcp.pop %v617
    %v619 = vmul.f32 %v617, %v618
    %v620 = vsub.f32 1.0, %v619
    %v621 = vmul.f32 %v618, %v620
    %v622 = vadd.f32 %v618, %v621
    %vm623 = vweird.f32 %v617
    %vm624 = vweird.f32 %v618
    %vm625 = vmor %vm623, %vm624
    %v626 = vsel %vm625, %v618, %v622
    %v627 = vand.u32 2147483647, %v617
    %vm628 = vcmp.eq.f32.partialorder %v627, 8.507059e+37
    %v629 = vand.u32 %v617, 2147483648
    %v630 = vor.u32 1.1754944e-38, %v629
    %v631 = vsel %vm628, %v630, %v626
    %v632 = vmul.f32 1.0, %v631
    %v633 = vtanh.pop %v613
    %v634 = vmul.f32 %v632, %v578
    %636 = vrot.lane.b32.xlu0 %v633, 64
    %v637 = vpop.permute.xlu0 %636
    %v639 = vmul.f32 %v632, %v637
    %641 = vrot.lane.b32.xlu0 %v639, 32
    %v642 = vpop.permute.xlu0 %641
    %v644 = vadd.f32 %v634, %v642
    %v645 = vtanh.pop %v644
    %647 = vrot.lane.b32.xlu0 %v645, 64
    %v648 = vpop.permute.xlu0 %647
    %v650 = vmul.f32 %v632, %v648
    %652 = vrot.lane.b32.xlu0 %v650, 32
    %v653 = vpop.permute.xlu0 %652
    %s655 = scalar_lea.vmem [#allocation5], 48
    %656 = vst.msk [vmem:[%s655] sm:$0xff] %vm197, %v653
    %s657 = scalar_lea.vmem [#allocation4], 56
    %v658 = vld [vmem:[%s657] sm:$0xff]
    %v659 = vpack.c.bf16 %v650, %v650
    %661 = vrot.lane.b32.xlu0 %v659, 32
    %v662 = vpop.permute.xlu0 %661
    %v664 = vsel %vm197, %v662, 0
    %666 = vmatpush.bf16.msra.mxu0 0
    %667 = vmatpush.bf16.msra.mxu0 0
    %668 = vmatpush.bf16.msra.mxu0 0
    %669 = vmatpush.bf16.msra.mxu0 0
    %670 = vmatpush.bf16.msra.mxu0 0
    %671 = vmatpush.bf16.msra.mxu0 0
    %672 = vmatpush.bf16.msra.mxu0 %v194
    %673 = vmatpush.bf16.msra.mxu0 %v193
    %674 = vmatmul.bf16.gmra.mxu0 %v664
    %v675 = vpop.f32.mrf.mxu0
    %v676 = vadd.f32 0.0, %v675
    %v677 = vpop.f32.mrf.mxu0
    %678 = vdwg.mxu0
    %v679 = vadd.f32 %v658, %v676
    %v680 = vxor.u32 %v679, 2147483648
    %v681 = vmul.f32 %v680, 1.442695
    %v682 = vpow.pop %v681
    %v683 = vadd.f32 %v682, 1.0
    %v684 = vrcp.pop %v683
    %v685 = vmul.f32 %v683, %v684
    %v686 = vsub.f32 1.0, %v685
    %v687 = vmul.f32 %v684, %v686
    %v688 = vadd.f32 %v684, %v687
    %vm689 = vweird.f32 %v683
    %vm690 = vweird.f32 %v684
    %vm691 = vmor %vm689, %vm690
    %v692 = vsel %vm691, %v684, %v688
    %v693 = vand.u32 2147483647, %v683
    %vm694 = vcmp.eq.f32.partialorder %v693, 8.507059e+37
    %v695 = vand.u32 %v683, 2147483648
    %v696 = vor.u32 1.1754944e-38, %v695
    %v697 = vsel %vm694, %v696, %v692
    %v698 = vmul.f32 1.0, %v697
    %v699 = vtanh.pop %v679
    %v700 = vmul.f32 %v698, %v644
    %702 = vrot.lane.b32.xlu0 %v699, 64
    %v703 = vpop.permute.xlu0 %702
    %v705 = vmul.f32 %v698, %v703
    %707 = vrot.lane.b32.xlu0 %v705, 32
    %v708 = vpop.permute.xlu0 %707
    %v710 = vadd.f32 %v700, %v708
    %v711 = vtanh.pop %v710
    %713 = vrot.lane.b32.xlu0 %v711, 64
    %v714 = vpop.permute.xlu0 %713
    %v716 = vmul.f32 %v698, %v714
    %718 = vrot.lane.b32.xlu0 %v716, 32
    %v719 = vpop.permute.xlu0 %718
    %s721 = scalar_lea.vmem [#allocation5], 56
    %722 = vst.msk [vmem:[%s721] sm:$0xff] %vm197, %v719
    %723 = vst.msk [vmem:[#allocation2] sm:$0xff] %vm197, %v719
    %725 = vrot.lane.b32.xlu0 %v710, 96
    %v726 = vpop.permute.xlu0 %725
    %728 = vst.msk [vmem:[#allocation3] sm:$0xff] %vm197, %v726
    %v729 = vld [vmem:[#allocation5] sm:$0xff]
    %v730 = vld [vmem:[#allocation5 + $0x8] sm:$0xff]
    %v731 = vld [vmem:[#allocation5 + $0x10] sm:$0xff]
    %v732 = vld [vmem:[#allocation5 + $0x18] sm:$0xff]
    %v733 = vld [vmem:[#allocation5 + $0x20] sm:$0xff]
    %v734 = vld [vmem:[#allocation5 + $0x28] sm:$0xff]
    %v735 = vld [vmem:[#allocation5 + $0x30] sm:$0xff]
    %v736 = vld [vmem:[#allocation5 + $0x38] sm:$0xff]
    %v737 = vpack.c.bf16 %v730, %v729
    %v738 = vpack.c.bf16 %v732, %v731
    %v739 = vpack.c.bf16 %v734, %v733
    %v740 = vpack.c.bf16 %v736, %v735
    %v741 = vld [vmem:[%s6] sm:$0xf]
    %v742 = vld [vmem:[%s6 + $0x4] sm:$0xf]
    %v743 = vld [vmem:[%s6 + $0x8] sm:$0xf]
    %v744 = vld [vmem:[%s6 + $0xc] sm:$0xf]
    %v745 = vld [vmem:[%s7] sm:$0x1]
    %v747 = vperm.slane %v745, 0
    %v753 = vunpack.c.l.b16 %v741
    %v754 = vunpack.c.l.b16 %v742
    %v755 = vunpack.c.l.b16 %v743
    %v756 = vunpack.c.l.b16 %v744
    %v757 = vpack.c.b16 %v754, %v753
    %v758 = vpack.c.b16 %v756, %v755
    %v762 = vsel %vm197, %v737, 0
    %v765 = vsel %vm197, %v738, 0
    %v768 = vsel %vm197, %v739, 0
    %v771 = vsel %vm197, %v740, 0
    %773 = vmatpush.bf16.msra.mxu0 0
    %774 = vmatpush.bf16.msra.mxu0 0
    %775 = vmatpush.bf16.msra.mxu0 0
    %776 = vmatpush.bf16.msra.mxu0 0
    %777 = vmatpush.bf16.msra.mxu0 0
    %778 = vmatpush.bf16.msra.mxu0 0
    %779 = vmatpush.bf16.msra.mxu0 %v758
    %780 = vmatpush.bf16.msra.mxu0 %v757
    %781 = vmatmul.bf16.gmra.mxu0 %v762
    %v782 = vpop.f32.mrf.mxu0
    %v783 = vadd.f32 %v747, %v782
    %v784 = vpop.f32.mrf.mxu0
    %v785 = vadd.f32 %v747, %v784
    %786 = vmatmul.bf16.gmra.mxu0 %v765
    %v787 = vpop.f32.mrf.mxu0
    %v788 = vadd.f32 %v747, %v787
    %v789 = vpop.f32.mrf.mxu0
    %v790 = vadd.f32 %v747, %v789
    %791 = vmatmul.bf16.gmra.mxu0 %v768
    %v792 = vpop.f32.mrf.mxu0
    %v793 = vadd.f32 %v747, %v792
    %v794 = vpop.f32.mrf.mxu0
    %v795 = vadd.f32 %v747, %v794
    %796 = vmatmul.bf16.gmra.mxu0 %v771
    %v797 = vpop.f32.mrf.mxu0
    %v798 = vadd.f32 %v747, %v797
    %v799 = vpop.f32.mrf.mxu0
    %v800 = vadd.f32 %v747, %v799
    %801 = vdwg.mxu0
    %vm802 = vcmask 64512
    %v803 = vsel %vm802, %v783, -inf
    %804 = vmax.xlane.f32.xlu0 %v803
    %v805 = vpop.xlane.xlu0 %804
    %v806 = vsel %vm802, %v785, -inf
    %807 = vmax.xlane.f32.xlu0 %v806
    %v808 = vpop.xlane.xlu0 %807
    %v809 = vsel %vm802, %v788, -inf
    %810 = vmax.xlane.f32.xlu0 %v809
    %v811 = vpop.xlane.xlu0 %810
    %v812 = vsel %vm802, %v790, -inf
    %813 = vmax.xlane.f32.xlu0 %v812
    %v814 = vpop.xlane.xlu0 %813
    %v815 = vsel %vm802, %v793, -inf
    %816 = vmax.xlane.f32.xlu0 %v815
    %v817 = vpop.xlane.xlu0 %816
    %v818 = vsel %vm802, %v795, -inf
    %819 = vmax.xlane.f32.xlu0 %v818
    %v820 = vpop.xlane.xlu0 %819
    %v821 = vsel %vm802, %v798, -inf
    %822 = vmax.xlane.f32.xlu0 %v821
    %v823 = vpop.xlane.xlu0 %822
    %v824 = vsel %vm802, %v800, -inf
    %825 = vmax.xlane.f32.xlu0 %v824
    %v826 = vpop.xlane.xlu0 %825
    %v827 = vsub.f32 %v783, %v805
    %v828 = vsub.f32 %v785, %v808
    %v829 = vsub.f32 %v788, %v811
    %v830 = vsub.f32 %v790, %v814
    %v831 = vsub.f32 %v793, %v817
    %v832 = vsub.f32 %v795, %v820
    %v833 = vsub.f32 %v798, %v823
    %v834 = vsub.f32 %v800, %v826
    %v835 = vmul.f32 %v827, 1.442695
    %v836 = vpow.pop %v835
    %v837 = vmul.f32 %v828, 1.442695
    %v838 = vpow.pop %v837
    %v839 = vmul.f32 %v829, 1.442695
    %v840 = vpow.pop %v839
    %v841 = vmul.f32 %v830, 1.442695
    %v842 = vpow.pop %v841
    %v843 = vmul.f32 %v831, 1.442695
    %v844 = vpow.pop %v843
    %v845 = vmul.f32 %v832, 1.442695
    %v846 = vpow.pop %v845
    %v847 = vmul.f32 %v833, 1.442695
    %v848 = vpow.pop %v847
    %v849 = vmul.f32 %v834, 1.442695
    %v850 = vpow.pop %v849
    %v851 = vsel %vm802, %v836, 0.0
    %852 = vadd.xlane.f32.xlu0 %v851
    %v853 = vpop.xlane.xlu0 %852
    %v854 = vsel %vm802, %v838, 0.0
    %855 = vadd.xlane.f32.xlu0 %v854
    %v856 = vpop.xlane.xlu0 %855
    %v857 = vsel %vm802, %v840, 0.0
    %858 = vadd.xlane.f32.xlu0 %v857
    %v859 = vpop.xlane.xlu0 %858
    %v860 = vsel %vm802, %v842, 0.0
    %861 = vadd.xlane.f32.xlu0 %v860
    %v862 = vpop.xlane.xlu0 %861
    %v863 = vsel %vm802, %v844, 0.0
    %864 = vadd.xlane.f32.xlu0 %v863
    %v865 = vpop.xlane.xlu0 %864
    %v866 = vsel %vm802, %v846, 0.0
    %867 = vadd.xlane.f32.xlu0 %v866
    %v868 = vpop.xlane.xlu0 %867
    %v869 = vsel %vm802, %v848, 0.0
    %870 = vadd.xlane.f32.xlu0 %v869
    %v871 = vpop.xlane.xlu0 %870
    %v872 = vsel %vm802, %v850, 0.0
    %873 = vadd.xlane.f32.xlu0 %v872
    %v874 = vpop.xlane.xlu0 %873
    %v875 = vlog2.pop %v853
    %v876 = vmul.f32 %v875, 0.6931472
    %v877 = vlog2.pop %v856
    %v878 = vmul.f32 %v877, 0.6931472
    %v879 = vlog2.pop %v859
    %v880 = vmul.f32 %v879, 0.6931472
    %v881 = vlog2.pop %v862
    %v882 = vmul.f32 %v881, 0.6931472
    %v883 = vlog2.pop %v865
    %v884 = vmul.f32 %v883, 0.6931472
    %v885 = vlog2.pop %v868
    %v886 = vmul.f32 %v885, 0.6931472
    %v887 = vlog2.pop %v871
    %v888 = vmul.f32 %v887, 0.6931472
    %v889 = vlog2.pop %v874
    %v890 = vmul.f32 %v889, 0.6931472
    %v891 = vsub.f32 %v827, %v876
    %v892 = vsub.f32 %v828, %v878
    %v893 = vsub.f32 %v829, %v880
    %v894 = vsub.f32 %v830, %v882
    %v895 = vsub.f32 %v831, %v884
    %v896 = vsub.f32 %v832, %v886
    %v897 = vsub.f32 %v833, %v888
    %v898 = vsub.f32 %v834, %v890
    %899 = vst.msk [vmem:[#allocation14] sm:$0xff] %vm802, %v891
    %900 = vst.msk [vmem:[#allocation14 + $0x8] sm:$0xff] %vm802, %v892
    %901 = vst.msk [vmem:[#allocation14 + $0x10] sm:$0xff] %vm802, %v893
    %902 = vst.msk [vmem:[#allocation14 + $0x18] sm:$0xff] %vm802, %v894
    %903 = vst.msk [vmem:[#allocation14 + $0x20] sm:$0xff] %vm802, %v895
    %904 = vst.msk [vmem:[#allocation14 + $0x28] sm:$0xff] %vm802, %v896
    %905 = vst.msk [vmem:[#allocation14 + $0x30] sm:$0xff] %vm802, %v897
    %906 = vst.msk [vmem:[#allocation14 + $0x38] sm:$0xff] %vm802, %v898
    // Predicated region
    $region54: #{tpu_custom_call.1} parent=1 // pred_check
      %p907 = pneg %p94
    $region55: #{tpu_custom_call.1} parent=1 // pred_check_branch
      %909 = sbr.rel (%p907) target = $region57
    $region56: #{tpu_custom_call.1} parent=1 // pred_region
      %910 = vst.msk [vmem:[#allocation15] sm:$0xff] %vm197, %v719
      %911 = vst.msk [vmem:[#allocation17] sm:$0xff] %vm197, %v726
    $region57: #{tpu_custom_call.1} parent=1 // pred_fallthru
      _
    // Predicated region
    $region58: #{tpu_custom_call.1} parent=1 // pred_check
      _
    $region59: #{tpu_custom_call.1} parent=1 // pred_check_branch
      %913 = sbr.rel (0) target = $region61
    $region60: #{tpu_custom_call.1} parent=1 // pred_region
      %915 = vsyncadd [#allocation8], 0
      %s916 = sshll.u32 [#allocation14], 4
      %s917 = int_to_ptr.vmem [resolvable:$true] %s916
      %s918 = sshll.u32 %s8, 4
      %s919 = int_to_ptr.hbm [resolvable:$true] %s918
      %924 = dma.vmem_to_hbm [thread:$0]  %s917, 1024, %s919, [#allocation8], 128, 128, 8
    $region61: #{tpu_custom_call.1} parent=1 // pred_fallthru
      _
    // Predicated region
    $region62: #{tpu_custom_call.1} parent=1 // pred_check
      _
    $region63: #{tpu_custom_call.1} parent=1 // pred_check_branch
      %926 = sbr.rel (0) target = $region65
    $region64: #{tpu_custom_call.1} parent=1 // pred_region
      %928 = vsyncadd [#allocation16], 0
      %s930 = sshll.u32 [#allocation15], 4
      %s931 = int_to_ptr.vmem [resolvable:$true] %s930
      %s932 = sshll.u32 %s9, 4
      %s933 = int_to_ptr.hbm [resolvable:$true] %s932
      %935 = dma.vmem_to_hbm [thread:$0]  %s931, 128, %s933, [#allocation16]
    $region65: #{tpu_custom_call.1} parent=1 // pred_fallthru
      _
    // Predicated region
    $region66: #{tpu_custom_call.1} parent=1 // pred_check
      _
    $region67: #{tpu_custom_call.1} parent=1 // pred_check_branch
      %937 = sbr.rel (0) target = $region69
    $region68: #{tpu_custom_call.1} parent=1 // pred_region
      %939 = vsyncadd [#allocation16], 0
      %s941 = sshll.u32 [#allocation17], 4
      %s942 = int_to_ptr.vmem [resolvable:$true] %s941
      %s943 = sshll.u32 %s10, 4
      %s944 = int_to_ptr.hbm [resolvable:$true] %s943
      %946 = dma.vmem_to_hbm [thread:$0]  %s942, 128, %s944, [#allocation16]
    $region69: #{tpu_custom_call.1} parent=1 // pred_fallthru
      _
    // Predicated region
    $region70: #{tpu_custom_call.1} parent=1 // pred_check
      _
    $region71: #{tpu_custom_call.1} parent=1 // pred_check_branch
      %948 = sbr.rel (0) target = $region73
    $region72: #{tpu_custom_call.1} parent=1 // pred_region
      %950 = dma.done [#allocation8], 1024
    $region73: #{tpu_custom_call.1} parent=1 // pred_fallthru
      _
    // Predicated region
    $region74: #{tpu_custom_call.1} parent=1 // pred_check
      _
    $region75: #{tpu_custom_call.1} parent=1 // pred_check_branch
      %952 = sbr.rel (0) target = $region77
    $region76: #{tpu_custom_call.1} parent=1 // pred_region
      %954 = dma.done [#allocation16], 128
    $region77: #{tpu_custom_call.1} parent=1 // pred_fallthru
      _
    // Predicated region
    $region78: #{tpu_custom_call.1} parent=1 // pred_check
      _
    $region79: #{tpu_custom_call.1} parent=1 // pred_check_branch
      %956 = sbr.rel (0) target = $region81
    $region80: #{tpu_custom_call.1} parent=1 // pred_region
      %958 = dma.done [#allocation16], 128
    $region81: #{tpu_custom_call.1} parent=1 // pred_fallthru
      _
    %959 = vsyncpa [#allocation7], 1
    %960 = vsyncpa [#allocation10], 1
    %961 = vsyncpa [#allocation13], 1
    %962 = vsyncpa [#allocation8], 1
    %963 = vsyncpa [#allocation16], 1

</llo_original>
